<compile_context>
chip_gen: v5e
topology: v5e:2x2
jax: 0.10.0
libtpu: 0.0.40
codegen_flags: <defaults>
</compile_context>

<pallas_src>
from functools import partial

import jax
import jax.numpy as jnp
from jax.experimental import pallas as pl
from jax.experimental.pallas import tpu as pltpu


def _mha_body(q_ref, k_ref, v_ref,
              wq_ref, bq_ref, wk_ref, bk_ref, wv_ref, bv_ref,
              wo_ref, bo_ref, o_ref, mask_ref, num_heads):
    """One grid step handles `block_b` batch elements.

    q/k/v_ref : (block_b, S, D) in the compute dtype (bf16 by default)
    w*_ref    : (D, D) pre-transposed weights (so x @ W is the projection);
                the 1/sqrt(dk) attention scale is folded into wq/bq host-side
    b*_ref    : (1, D) float32 biases
    mask_ref  : optional (block_b, S, S) float32 additive bias (0 or -1e9)
    o_ref     : (block_b, S, D) output in the original input dtype
    """
    block_b, S, D = q_ref.shape
    dk = D // num_heads
    G = block_b * num_heads          # collapsed (head, batch) groups
    cdt = q_ref.dtype                # MXU operand dtype (bf16 or f32)
    f32 = jnp.float32

    q2 = q_ref[...].reshape(block_b * S, D)
    k2 = k_ref[...].reshape(block_b * S, D)
    v2 = v_ref[...].reshape(block_b * S, D)

    # Projections: plain [N,D]x[D,D] MXU contractions, f32 accumulation,
    # bias add in f32 (no in-kernel weight transpose).
    qp = jnp.dot(q2, wq_ref[...], preferred_element_type=f32) + bq_ref[...]
    kp = jnp.dot(k2, wk_ref[...], preferred_element_type=f32) + bk_ref[...]
    vp = jnp.dot(v2, wv_ref[...], preferred_element_type=f32) + bv_ref[...]

    def split_heads(x):
        # (N, D) -> (N, H, dk) -> (H, N, dk) -> (H*block_b, S, dk)
        # Only leading/sublane dims permute; the lane dim stays put.
        x = x.reshape(block_b * S, num_heads, dk)
        x = jnp.transpose(x, (1, 0, 2))
        return x.reshape(G, S, dk)

    qh = split_heads(qp).astype(cdt)
    kh = split_heads(kp).astype(cdt)
    vh = split_heads(vp).astype(cdt)

    # Head-batched attention: single batched contraction over all (head, batch)
    # groups -- no per-head loop, no explicit k transpose, no concatenate.
    # Scale already folded into the Q projection.
    scores = jnp.einsum('gqd,gkd->gqk', qh, kh,
                        preferred_element_type=f32)            # (G, S, S) f32

    if mask_ref is not None:
        # Additive mask bias (0 keep / -1e9 masked), broadcast over heads.
        mb = mask_ref[...]                                     # (block_b, S, S) f32
        scores = scores + jnp.broadcast_to(
            mb[None], (num_heads, block_b, S, S)).reshape(G, S, S)

    m = jnp.max(scores, axis=-1, keepdims=True)
    e = jnp.exp(scores - m)
    denom = jnp.sum(e, axis=-1, keepdims=True)
    w = e * pl.reciprocal(denom, approx=True)                  # EUP reciprocal

    attn = jnp.einsum('gqk,gkd->gqd', w.astype(cdt), vh,
                      preferred_element_type=f32)              # (G, S, dk) f32

    # Merge heads back (inverse of split): (G, S, dk) -> (N, D) in concat order.
    attn = attn.reshape(num_heads, block_b * S, dk)
    attn = jnp.transpose(attn, (1, 0, 2)).reshape(block_b * S, D)

    out = jnp.dot(attn.astype(cdt), wo_ref[...],
                  preferred_element_type=f32) + bo_ref[...]
    o_ref[...] = out.reshape(block_b, S, D).astype(o_ref.dtype)


def mha_kernel(q_ref, k_ref, v_ref,
               wq_ref, bq_ref, wk_ref, bk_ref, wv_ref, bv_ref,
               wo_ref, bo_ref, o_ref, *, num_heads):
    _mha_body(q_ref, k_ref, v_ref, wq_ref, bq_ref, wk_ref, bk_ref,
              wv_ref, bv_ref, wo_ref, bo_ref, o_ref, None, num_heads)


def mha_kernel_masked(q_ref, k_ref, v_ref,
                      wq_ref, bq_ref, wk_ref, bk_ref, wv_ref, bv_ref,
                      wo_ref, bo_ref, mask_ref, o_ref, *, num_heads):
    _mha_body(q_ref, k_ref, v_ref, wq_ref, bq_ref, wk_ref, bk_ref,
              wv_ref, bv_ref, wo_ref, bo_ref, o_ref, mask_ref, num_heads)


def _pick_block_b(B, S, target_rows=512):
    """Largest divisor of B with block_b*S <= target_rows (amortize per-step
    overhead / fill MXU rows), but keep >= 2 grid steps when B >= 2 so a
    second TensorCore (v7x) gets work."""
    best = 1
    for cand in range(1, B + 1):
        if B % cand == 0 and cand * S <= target_rows:
            best = cand
    if B >= 2 and B // best < 2:
        for cand in range(best - 1, 0, -1):
            if B % cand == 0 and B // cand >= 2:
                best = cand
                break
    return best


def multi_head_attention(q, k, v, params, num_heads, mask=None, *,
                         compute_dtype=jnp.bfloat16, block_b=None):
    B, S, D = q.shape
    assert D % num_heads == 0
    wq, bq, wk, bk, wv, bv, wo, bo = params

    dk = D // num_heads
    scale = 1.0 / jnp.sqrt(jnp.float32(dk))
    f32 = jnp.float32

    # Host-side prep (constants, one-time):
    #  * pre-transpose weights so the kernel does plain x @ W contractions
    #  * fold the 1/sqrt(dk) attention scale into the Q projection
    #  * cast MXU operands to the compute dtype (f32 accumulation kept in-kernel)
    wq_t = (wq.astype(f32).T * scale).astype(compute_dtype)
    wk_t = wk.astype(f32).T.astype(compute_dtype)
    wv_t = wv.astype(f32).T.astype(compute_dtype)
    wo_t = wo.astype(f32).T.astype(compute_dtype)
    bq2 = (bq.astype(f32) * scale).reshape(1, D)
    bk2 = bk.astype(f32).reshape(1, D)
    bv2 = bv.astype(f32).reshape(1, D)
    bo2 = bo.astype(f32).reshape(1, D)

    qc = q.astype(compute_dtype)
    kc = k.astype(compute_dtype)
    vc = v.astype(compute_dtype)

    if block_b is None:
        block_b = _pick_block_b(B, S)
    assert B % block_b == 0

    vec_spec = pl.BlockSpec((block_b, S, D), lambda b: (b, 0, 0))
    w_spec = pl.BlockSpec((D, D), lambda b: (0, 0))
    b_spec = pl.BlockSpec((1, D), lambda b: (0, 0))

    inputs = [qc, kc, vc, wq_t, bq2, wk_t, bk2, wv_t, bv2, wo_t, bo2]
    in_specs = [vec_spec, vec_spec, vec_spec,
                w_spec, b_spec, w_spec, b_spec, w_spec, b_spec,
                w_spec, b_spec]

    if mask is not None:
        # PyTorch: scores.masked_fill(mask == 0, -1e9). Convert (host-side) to a
        # float32 additive bias broadcast to (B, S, S); broadcast over heads in-kernel.
        mask_b = jnp.broadcast_to(mask, (B, S, S))
        mask_bias = jnp.where(mask_b != 0, f32(0.0), f32(-1e9)).astype(f32)
        inputs.append(mask_bias)
        in_specs.append(pl.BlockSpec((block_b, S, S), lambda b: (b, 0, 0)))
        kern = partial(mha_kernel_masked, num_heads=num_heads)
    else:
        kern = partial(mha_kernel, num_heads=num_heads)

    return pl.pallas_call(
        kern,
        out_shape=jax.ShapeDtypeStruct((B, S, D), q.dtype),
        grid=(B // block_b,),
        in_specs=in_specs,
        out_specs=pl.BlockSpec((block_b, S, D), lambda b: (b, 0, 0)),
        compiler_params=pltpu.CompilerParams(
            dimension_semantics=("parallel",),
            vmem_limit_bytes=32 * 1024 * 1024),
    )(*inputs)


def mha_reference(q, k, v, params, num_heads, mask=None):
    """Pure-JAX f32 reference mirroring the PyTorch forward."""
    B, S, D = q.shape
    dk = D // num_heads
    wq, bq, wk, bk, wv, bv, wo, bo = params
    qp = q @ wq.T + bq
    kp = k @ wk.T + bk
    vp = v @ wv.T + bv

    def split(x):
        return x.reshape(B, S, num_heads, dk).transpose(0, 2, 1, 3)  # (B,H,S,dk)

    qh, kh, vh = split(qp), split(kp), split(vp)
    scores = jnp.einsum('bhqd,bhkd->bhqk', qh, kh) / jnp.sqrt(jnp.float32(dk))
    if mask is not None:
        mask_b = jnp.broadcast_to(mask, (B, S, S))
        scores = jnp.where(mask_b[:, None] != 0, scores, jnp.float32(-1e9))
    w = jax.nn.softmax(scores, axis=-1)
    attn = jnp.einsum('bhqk,bhkd->bhqd', w, vh)
    attn = attn.transpose(0, 2, 1, 3).reshape(B, S, D)
    return attn @ wo.T + bo


if __name__ == "__main__":
    B, S, d_model, num_heads = 2, 8, 32, 4

    key = jax.random.PRNGKey(0)
    keys = jax.random.split(key, 12)
    bound = 1.0 / jnp.sqrt(jnp.float32(d_model))

    def lin_init(kw, kb):
        w = jax.random.uniform(kw, (d_model, d_model), jnp.float32, -bound, bound)
        b = jax.random.uniform(kb, (d_model,), jnp.float32, -bound, bound)
        return w, b

    wq, bq = lin_init(keys[0], keys[1])
    wk, bk = lin_init(keys[2], keys[3])
    wv, bv = lin_init(keys[4], keys[5])
    wo, bo = lin_init(keys[6], keys[7])
    params = (wq, bq, wk, bk, wv, bv, wo, bo)

    q = jax.random.normal(keys[8], (B, S, d_model), jnp.float32)
    k = jax.random.normal(keys[9], (B, S, d_model), jnp.float32)
    v = jax.random.normal(keys[10], (B, S, d_model), jnp.float32)

    # ---- mask = None path ----
    ref = mha_reference(q, k, v, params, num_heads)

    out_bf16 = jax.block_until_ready(
        multi_head_attention(q, k, v, params, num_heads,
                             compute_dtype=jnp.bfloat16))
    assert out_bf16.shape == (B, S, d_model)
    assert out_bf16.dtype == q.dtype
    assert jnp.allclose(out_bf16, ref, atol=5e-2, rtol=5e-2), "bf16 path mismatch vs reference"

    out_f32 = jax.block_until_ready(
        multi_head_attention(q, k, v, params, num_heads,
                             compute_dtype=jnp.float32))
    assert jnp.allclose(out_f32, ref, atol=5e-3, rtol=5e-3), "f32 path mismatch vs reference"

    # ---- masked (causal) path ----
    causal = jnp.tril(jnp.ones((S, S), jnp.int32))          # broadcast to (B,S,S)
    ref_m = mha_reference(q, k, v, params, num_heads, mask=causal)

    out_m_f32 = jax.block_until_ready(
        multi_head_attention(q, k, v, params, num_heads, mask=causal,
                             compute_dtype=jnp.float32))
    assert jnp.allclose(out_m_f32, ref_m, atol=5e-3, rtol=5e-3), "masked f32 path mismatch"

    out_m_bf16 = jax.block_until_ready(
        multi_head_attention(q, k, v, params, num_heads, mask=causal,
                             compute_dtype=jnp.bfloat16))
    assert jnp.allclose(out_m_bf16, ref_m, atol=5e-2, rtol=5e-2), "masked bf16 path mismatch"

    print("KERNEL_OK")
</pallas_src>

<mosaic_0001>
module attributes {stable_mosaic.version = 11 : i64} {
  func.func @mha_kernel(%arg0: i32, %arg1: memref<1x8x32xbf16, #tpu.memory_space<vmem>>, %arg2: memref<1x8x32xbf16, #tpu.memory_space<vmem>>, %arg3: memref<1x8x32xbf16, #tpu.memory_space<vmem>>, %arg4: memref<32x32xbf16, #tpu.memory_space<vmem>>, %arg5: memref<1x32xf32, #tpu.memory_space<vmem>>, %arg6: memref<32x32xbf16, #tpu.memory_space<vmem>>, %arg7: memref<1x32xf32, #tpu.memory_space<vmem>>, %arg8: memref<32x32xbf16, #tpu.memory_space<vmem>>, %arg9: memref<1x32xf32, #tpu.memory_space<vmem>>, %arg10: memref<32x32xbf16, #tpu.memory_space<vmem>>, %arg11: memref<1x32xf32, #tpu.memory_space<vmem>>, %arg12: memref<1x8x32xf32, #tpu.memory_space<vmem>>) attributes {dimension_semantics = [#tpu.dimension_semantics<parallel>], iteration_bounds = array<i64: 2>, scalar_prefetch = 0 : i64, scratch_operands = 0 : i64, tpu.core_type = #tpu.core_type<tc>, window_params = [{transform_indices = @transform_0, window_bounds = array<i64: 1, 8, 32>}, {transform_indices = @transform_1, window_bounds = array<i64: 1, 8, 32>}, {transform_indices = @transform_2, window_bounds = array<i64: 1, 8, 32>}, {pipeline_mode = #tpu.pipeline_mode<synchronous>, transform_indices = @transform_3, window_bounds = array<i64: 32, 32>}, {pipeline_mode = #tpu.pipeline_mode<synchronous>, transform_indices = @transform_4, window_bounds = array<i64: 1, 32>}, {pipeline_mode = #tpu.pipeline_mode<synchronous>, transform_indices = @transform_5, window_bounds = array<i64: 32, 32>}, {pipeline_mode = #tpu.pipeline_mode<synchronous>, transform_indices = @transform_6, window_bounds = array<i64: 1, 32>}, {pipeline_mode = #tpu.pipeline_mode<synchronous>, transform_indices = @transform_7, window_bounds = array<i64: 32, 32>}, {pipeline_mode = #tpu.pipeline_mode<synchronous>, transform_indices = @transform_8, window_bounds = array<i64: 1, 32>}, {pipeline_mode = #tpu.pipeline_mode<synchronous>, transform_indices = @transform_9, window_bounds = array<i64: 32, 32>}, {pipeline_mode = #tpu.pipeline_mode<synchronous>, transform_indices = @transform_10, window_bounds = array<i64: 1, 32>}, {transform_indices = @transform_11, window_bounds = array<i64: 1, 8, 32>}]} {
    %c0 = arith.constant 0 : index
    %c0_0 = arith.constant 0 : index
    %c0_1 = arith.constant 0 : index
    %0 = vector.load %arg1[%c0, %c0_0, %c0_1] : memref<1x8x32xbf16, #tpu.memory_space<vmem>>, vector<1x8x32xbf16>
    %1 = vector.shape_cast %0 : vector<1x8x32xbf16> to vector<8x32xbf16>
    %c0_2 = arith.constant 0 : index
    %c0_3 = arith.constant 0 : index
    %c0_4 = arith.constant 0 : index
    %2 = vector.load %arg2[%c0_2, %c0_3, %c0_4] : memref<1x8x32xbf16, #tpu.memory_space<vmem>>, vector<1x8x32xbf16>
    %3 = vector.shape_cast %2 : vector<1x8x32xbf16> to vector<8x32xbf16>
    %c0_5 = arith.constant 0 : index
    %c0_6 = arith.constant 0 : index
    %c0_7 = arith.constant 0 : index
    %4 = vector.load %arg3[%c0_5, %c0_6, %c0_7] : memref<1x8x32xbf16, #tpu.memory_space<vmem>>, vector<1x8x32xbf16>
    %5 = vector.shape_cast %4 : vector<1x8x32xbf16> to vector<8x32xbf16>
    %c0_8 = arith.constant 0 : index
    %c0_9 = arith.constant 0 : index
    %6 = vector.load %arg4[%c0_8, %c0_9] : memref<32x32xbf16, #tpu.memory_space<vmem>>, vector<32x32xbf16>
    %cst = arith.constant dense<0.000000e+00> : vector<8x32xf32>
    %7 = tpu.matmul %1, %6, %cst {dimension_numbers = #tpu.dot_dimension_numbers<[1], [0], [0], [1], [0, 0, 1, 1], [], []>} : vector<8x32xbf16>, vector<32x32xbf16>, vector<8x32xf32> -> vector<8x32xf32>
    %c0_10 = arith.constant 0 : index
    %c0_11 = arith.constant 0 : index
    %8 = vector.load %arg5[%c0_10, %c0_11] : memref<1x32xf32, #tpu.memory_space<vmem>>, vector<1x32xf32>
    %9 = vector.broadcast %8 : vector<1x32xf32> to vector<8x32xf32>
    %10 = arith.addf %7, %9 : vector<8x32xf32>
    %c0_12 = arith.constant 0 : index
    %c0_13 = arith.constant 0 : index
    %11 = vector.load %arg6[%c0_12, %c0_13] : memref<32x32xbf16, #tpu.memory_space<vmem>>, vector<32x32xbf16>
    %cst_14 = arith.constant dense<0.000000e+00> : vector<8x32xf32>
    %12 = tpu.matmul %3, %11, %cst_14 {dimension_numbers = #tpu.dot_dimension_numbers<[1], [0], [0], [1], [0, 0, 1, 1], [], []>} : vector<8x32xbf16>, vector<32x32xbf16>, vector<8x32xf32> -> vector<8x32xf32>
    %c0_15 = arith.constant 0 : index
    %c0_16 = arith.constant 0 : index
    %13 = vector.load %arg7[%c0_15, %c0_16] : memref<1x32xf32, #tpu.memory_space<vmem>>, vector<1x32xf32>
    %14 = vector.broadcast %13 : vector<1x32xf32> to vector<8x32xf32>
    %15 = arith.addf %12, %14 : vector<8x32xf32>
    %c0_17 = arith.constant 0 : index
    %c0_18 = arith.constant 0 : index
    %16 = vector.load %arg8[%c0_17, %c0_18] : memref<32x32xbf16, #tpu.memory_space<vmem>>, vector<32x32xbf16>
    %cst_19 = arith.constant dense<0.000000e+00> : vector<8x32xf32>
    %17 = tpu.matmul %5, %16, %cst_19 {dimension_numbers = #tpu.dot_dimension_numbers<[1], [0], [0], [1], [0, 0, 1, 1], [], []>} : vector<8x32xbf16>, vector<32x32xbf16>, vector<8x32xf32> -> vector<8x32xf32>
    %c0_20 = arith.constant 0 : index
    %c0_21 = arith.constant 0 : index
    %18 = vector.load %arg9[%c0_20, %c0_21] : memref<1x32xf32, #tpu.memory_space<vmem>>, vector<1x32xf32>
    %19 = vector.broadcast %18 : vector<1x32xf32> to vector<8x32xf32>
    %20 = arith.addf %17, %19 : vector<8x32xf32>
    %21 = vector.shape_cast %10 : vector<8x32xf32> to vector<8x4x8xf32>
    %22 = tpu.transpose %21, [1, 0, 2] : vector<8x4x8xf32> -> vector<4x8x8xf32>
    %23 = arith.truncf %22 : vector<4x8x8xf32> to vector<4x8x8xbf16>
    %24 = vector.shape_cast %15 : vector<8x32xf32> to vector<8x4x8xf32>
    %25 = tpu.transpose %24, [1, 0, 2] : vector<8x4x8xf32> -> vector<4x8x8xf32>
    %26 = arith.truncf %25 : vector<4x8x8xf32> to vector<4x8x8xbf16>
    %27 = vector.shape_cast %20 : vector<8x32xf32> to vector<8x4x8xf32>
    %28 = tpu.transpose %27, [1, 0, 2] : vector<8x4x8xf32> -> vector<4x8x8xf32>
    %29 = arith.truncf %28 : vector<4x8x8xf32> to vector<4x8x8xbf16>
    "tpu.trace_start"() <{level = 10 : i32, message = "gqd,gkd->gqk"}> : () -> ()
    %cst_22 = arith.constant dense<0.000000e+00> : vector<4x8x8xf32>
    %30 = tpu.matmul %23, %26, %cst_22 {dimension_numbers = #tpu.dot_dimension_numbers<[2], [2], [1], [1], [0, 0, 0, 1, 1, 1], [0], [0]>} : vector<4x8x8xbf16>, vector<4x8x8xbf16>, vector<4x8x8xf32> -> vector<4x8x8xf32>
    "tpu.trace_stop"() : () -> ()
    %cst_23 = arith.constant dense<0xFF800000> : vector<4x8xf32>
    %31 = vector.multi_reduction <maximumf>, %30, %cst_23 [2] : vector<4x8x8xf32> to vector<4x8xf32>
    %32 = vector.shape_cast %31 : vector<4x8xf32> to vector<4x8x1xf32>
    %33 = vector.broadcast %32 : vector<4x8x1xf32> to vector<4x8x8xf32>
    %34 = arith.subf %30, %33 : vector<4x8x8xf32>
    %35 = math.exp %34 : vector<4x8x8xf32>
    %cst_24 = arith.constant dense<0.000000e+00> : vector<4x8xf32>
    %36 = vector.multi_reduction <add>, %35, %cst_24 [2] : vector<4x8x8xf32> to vector<4x8xf32>
    %37 = vector.shape_cast %36 : vector<4x8xf32> to vector<4x8x1xf32>
    %38 = tpu.reciprocal %37 {approx = true} : vector<4x8x1xf32> -> vector<4x8x1xf32>
    %39 = vector.broadcast %38 : vector<4x8x1xf32> to vector<4x8x8xf32>
    %40 = arith.mulf %35, %39 : vector<4x8x8xf32>
    %41 = arith.truncf %40 : vector<4x8x8xf32> to vector<4x8x8xbf16>
    "tpu.trace_start"() <{level = 10 : i32, message = "gqk,gkd->gqd"}> : () -> ()
    %cst_25 = arith.constant dense<0.000000e+00> : vector<4x8x8xf32>
    %42 = tpu.matmul %41, %29, %cst_25 {dimension_numbers = #tpu.dot_dimension_numbers<[2], [1], [1], [2], [0, 0, 0, 1, 1, 2], [0], [0]>} : vector<4x8x8xbf16>, vector<4x8x8xbf16>, vector<4x8x8xf32> -> vector<4x8x8xf32>
    "tpu.trace_stop"() : () -> ()
    %43 = tpu.transpose %42, [1, 0, 2] : vector<4x8x8xf32> -> vector<8x4x8xf32>
    %44 = vector.shape_cast %43 : vector<8x4x8xf32> to vector<8x32xf32>
    %45 = arith.truncf %44 : vector<8x32xf32> to vector<8x32xbf16>
    %c0_26 = arith.constant 0 : index
    %c0_27 = arith.constant 0 : index
    %46 = vector.load %arg10[%c0_26, %c0_27] : memref<32x32xbf16, #tpu.memory_space<vmem>>, vector<32x32xbf16>
    %cst_28 = arith.constant dense<0.000000e+00> : vector<8x32xf32>
    %47 = tpu.matmul %45, %46, %cst_28 {dimension_numbers = #tpu.dot_dimension_numbers<[1], [0], [0], [1], [0, 0, 1, 1], [], []>} : vector<8x32xbf16>, vector<32x32xbf16>, vector<8x32xf32> -> vector<8x32xf32>
    %c0_29 = arith.constant 0 : index
    %c0_30 = arith.constant 0 : index
    %48 = vector.load %arg11[%c0_29, %c0_30] : memref<1x32xf32, #tpu.memory_space<vmem>>, vector<1x32xf32>
    %49 = vector.broadcast %48 : vector<1x32xf32> to vector<8x32xf32>
    %50 = arith.addf %47, %49 : vector<8x32xf32>
    %51 = vector.shape_cast %50 : vector<8x32xf32> to vector<1x8x32xf32>
    %c0_31 = arith.constant 0 : index
    %c0_32 = arith.constant 0 : index
    %c0_33 = arith.constant 0 : index
    %52 = vector.load %arg12[%c0_31, %c0_32, %c0_33] : memref<1x8x32xf32, #tpu.memory_space<vmem>>, vector<1x8x32xf32>
    tpu.vector_store %arg12[%c0_31, %c0_32, %c0_33], %51 {strides = array<i32>} : memref<1x8x32xf32, #tpu.memory_space<vmem>>, vector<1x8x32xf32>,
    return
  }
  func.func @transform_0(%arg0: i32) -> (i32, i32, i32) {
    %c0_i32 = arith.constant 0 : i32
    %c0_i32_0 = arith.constant 0 : i32
    %c0_i32_1 = arith.constant 0 : i32
    return %arg0, %c0_i32, %c0_i32_0 : i32, i32, i32
  }
  func.func @transform_1(%arg0: i32) -> (i32, i32, i32) {
    %c0_i32 = arith.constant 0 : i32
    %c0_i32_0 = arith.constant 0 : i32
    %c0_i32_1 = arith.constant 0 : i32
    return %arg0, %c0_i32, %c0_i32_0 : i32, i32, i32
  }
  func.func @transform_2(%arg0: i32) -> (i32, i32, i32) {
    %c0_i32 = arith.constant 0 : i32
    %c0_i32_0 = arith.constant 0 : i32
    %c0_i32_1 = arith.constant 0 : i32
    return %arg0, %c0_i32, %c0_i32_0 : i32, i32, i32
  }
  func.func @transform_3(%arg0: i32) -> (i32, i32) {
    %c0_i32 = arith.constant 0 : i32
    %c0_i32_0 = arith.constant 0 : i32
    %c0_i32_1 = arith.constant 0 : i32
    return %c0_i32, %c0_i32_0 : i32, i32
  }
  func.func @transform_4(%arg0: i32) -> (i32, i32) {
    %c0_i32 = arith.constant 0 : i32
    %c0_i32_0 = arith.constant 0 : i32
    %c0_i32_1 = arith.constant 0 : i32
    return %c0_i32, %c0_i32_0 : i32, i32
  }
  func.func @transform_5(%arg0: i32) -> (i32, i32) {
    %c0_i32 = arith.constant 0 : i32
    %c0_i32_0 = arith.constant 0 : i32
    %c0_i32_1 = arith.constant 0 : i32
    return %c0_i32, %c0_i32_0 : i32, i32
  }
  func.func @transform_6(%arg0: i32) -> (i32, i32) {
    %c0_i32 = arith.constant 0 : i32
    %c0_i32_0 = arith.constant 0 : i32
    %c0_i32_1 = arith.constant 0 : i32
    return %c0_i32, %c0_i32_0 : i32, i32
  }
  func.func @transform_7(%arg0: i32) -> (i32, i32) {
    %c0_i32 = arith.constant 0 : i32
    %c0_i32_0 = arith.constant 0 : i32
    %c0_i32_1 = arith.constant 0 : i32
    return %c0_i32, %c0_i32_0 : i32, i32
  }
  func.func @transform_8(%arg0: i32) -> (i32, i32) {
    %c0_i32 = arith.constant 0 : i32
    %c0_i32_0 = arith.constant 0 : i32
    %c0_i32_1 = arith.constant 0 : i32
    return %c0_i32, %c0_i32_0 : i32, i32
  }
  func.func @transform_9(%arg0: i32) -> (i32, i32) {
    %c0_i32 = arith.constant 0 : i32
    %c0_i32_0 = arith.constant 0 : i32
    %c0_i32_1 = arith.constant 0 : i32
    return %c0_i32, %c0_i32_0 : i32, i32
  }
  func.func @transform_10(%arg0: i32) -> (i32, i32) {
    %c0_i32 = arith.constant 0 : i32
    %c0_i32_0 = arith.constant 0 : i32
    %c0_i32_1 = arith.constant 0 : i32
    return %c0_i32, %c0_i32_0 : i32, i32
  }
  func.func @transform_11(%arg0: i32) -> (i32, i32, i32) {
    %c0_i32 = arith.constant 0 : i32
    %c0_i32_0 = arith.constant 0 : i32
    %c0_i32_1 = arith.constant 0 : i32
    return %arg0, %c0_i32, %c0_i32_0 : i32, i32, i32
  }
}

</mosaic_0001>

<llo_original>
// kernel: tpu_custom_call.1
$region0: #{tpu_custom_call.1}
  #allocation0 [shape = 'u32[]', space=smem, size = 0x4, offset = 0x4, fixed_abs, tag = 'smem constant byte address 0x4 - core index']
  #allocation1 [shape = 'u32[72,128]{1,0:T(1,128)}', space=vmem, size = 0x9000, scoped, tag = 'internal scratch']
  %s0 = inlined_call_operand.hbm [shape: bf16[2,8,32], index: 0, kind: input, shape index: {}]
  %s1 = inlined_call_operand.hbm [shape: bf16[2,8,32], index: 1, kind: input, shape index: {}]
  %s2 = inlined_call_operand.hbm [shape: bf16[2,8,32], index: 2, kind: input, shape index: {}]
  %s3 = inlined_call_operand.hbm [shape: bf16[32,32], index: 3, kind: input, shape index: {}]
  %s4 = inlined_call_operand.vmem [shape: f32[1,32], index: 4, kind: input, shape index: {}]
  %s5 = inlined_call_operand.hbm [shape: bf16[32,32], index: 5, kind: input, shape index: {}]
  %s6 = inlined_call_operand.vmem [shape: f32[1,32], index: 6, kind: input, shape index: {}]
  %s7 = inlined_call_operand.hbm [shape: bf16[32,32], index: 7, kind: input, shape index: {}]
  %s8 = inlined_call_operand.vmem [shape: f32[1,32], index: 8, kind: input, shape index: {}]
  %s9 = inlined_call_operand.hbm [shape: bf16[32,32], index: 9, kind: input, shape index: {}]
  %s10 = inlined_call_operand.vmem [shape: f32[1,32], index: 10, kind: input, shape index: {}]
  %s11 = inlined_call_operand.hbm [shape: f32[2,8,32], index: 11, kind: output, shape index: {}]
  %s12 = sld [smem:[#allocation0]]
  $region105: #{tpu_custom_call.1} parent=0
    _
  %s14 = ssub.s32 1, %s12
  %s15 = scalar_select 0, %s14, %s12
  $region1: #{tpu_custom_call.1} parent=0
    #allocation2 [shape = 'u8[4096]{0}', space=vmem, size = 0x1000, scoped, tag = 'input window, operand 0']
    #allocation3 [shape = 's32[2]{0}', space=sflag, size = 0x8, scoped, tag = 'scoped memory for tpu_custom_call.1']
    #allocation4 [shape = 's32[2]{0}', space=sflag, size = 0x8, scoped, tag = 'scoped memory for tpu_custom_call.1']
    #allocation5 [shape = 'u8[4096]{0}', space=vmem, size = 0x1000, scoped, tag = 'input window, operand 1']
    #allocation6 [shape = 's32[2]{0}', space=sflag, size = 0x8, scoped, tag = 'scoped memory for tpu_custom_call.1']
    #allocation7 [shape = 'u8[4096]{0}', space=vmem, size = 0x1000, scoped, tag = 'input window, operand 2']
    #allocation8 [shape = 'u8[8192]{0}', space=vmem, size = 0x2000, scoped, tag = 'input window, operand 3, single buffered']
    #allocation9 [shape = 's32[1]{0}', space=sflag, size = 0x4, scoped, tag = 'scoped memory for tpu_custom_call.1']
    #allocation10 [shape = 'u8[8192]{0}', space=vmem, size = 0x2000, scoped, tag = 'input window, operand 5, single buffered']
    #allocation11 [shape = 'u8[8192]{0}', space=vmem, size = 0x2000, scoped, tag = 'input window, operand 7, single buffered']
    #allocation12 [shape = 's32[1]{0}', space=sflag, size = 0x4, scoped, tag = 'scoped memory for tpu_custom_call.1']
    #allocation13 [shape = 'u8[8192]{0}', space=vmem, size = 0x2000, scoped, tag = 'input window, operand 9, single buffered']
    #allocation14 [shape = 'u8[8192]{0}', space=vmem, size = 0x2000, scoped, tag = 'output window, operand 0']
    %16 = vsyncpa [#allocation3], 0
    %s17 = scalar_lea.sflag [#allocation3], 1
    %18 = vsyncpa %s17, 0
    %19 = vsyncpa [#allocation6], 0
    %s20 = scalar_lea.sflag [#allocation6], 1
    %21 = vsyncpa %s20, 0
    %22 = vsyncpa [#allocation9], 0
    %23 = vsyncpa [#allocation12], 0
    %24 = vsyncpa [#allocation4], 0
    %s25 = scalar_lea.sflag [#allocation4], 1
    %26 = vsyncpa %s25, 0
    loop: start=0, step=1, limit=4
    $region2: #{tpu_custom_call.1} parent=1 // loop_pre_header
      _
    $region3: #{tpu_custom_call.1} parent=1 // loop_header
      %s28 = sphi 0, %s32
      %p29 = scmp.ge.s32.totalorder %s28, 4
      %s38 = sphi 0, %s40
      %s41 = sphi 0, %s38
      %s42 = sphi 0, %s41
      %s58 = sphi 0, %s42
      %s64 = sphi 0, %s66
      %s67 = sphi 0, %s64
      %s68 = sphi 0, %s67
      %s84 = sphi 0, %s68
      %s90 = sphi 0, %s92
      %s93 = sphi 0, %s90
      %s94 = sphi 0, %s93
      %s110 = sphi 0, %s94
      %s114 = sphi 0, %s114
      %s116 = sphi 0, %s114
      %s117 = sphi 0, %s116
      %s131 = sphi 0, %s117
      %s135 = sphi 0, %s135
      %s137 = sphi 0, %s135
      %s138 = sphi 0, %s137
      %s152 = sphi 0, %s138
      %s156 = sphi 0, %s156
      %s158 = sphi 0, %s156
      %s159 = sphi 0, %s158
      %s173 = sphi 0, %s159
      %s177 = sphi 0, %s177
      %s179 = sphi 0, %s177
      %s180 = sphi 0, %s179
      %s194 = sphi 0, %s180
      %s198 = sphi 0, %s198
      %s200 = sphi 0, %s198
      %s201 = sphi 0, %s200
      %s215 = sphi 0, %s201
      %s219 = sphi 0, %s219
      %s221 = sphi 0, %s219
      %s222 = sphi 0, %s221
      %s236 = sphi 0, %s222
      %s240 = sphi 0, %s240
      %s242 = sphi 0, %s240
      %s243 = sphi 0, %s242
      %s257 = sphi 0, %s243
      %s261 = sphi 0, %s261
      %s263 = sphi 0, %s261
      %s264 = sphi 0, %s263
      %s278 = sphi 0, %s264
      %s284 = sphi 0, %s286
      %s287 = sphi 0, %s284
      %s288 = sphi 0, %s287
      %s304 = sphi 0, %s288
    $region4: #{tpu_custom_call.1} parent=1 // loop_header_branch
      %31 = sbr.rel (%p29) target = $region8
    $region5: #{tpu_custom_call.1} parent=1 // loop_body
      %s33 = ssub.s32 %s28, 1
      %s34 = ssub.s32 %s28, 2
      %s35 = sadd.s32 %s28, 1
      %s36 = ssub.s32 %s28, %s35
      %p37 = scmp.eq.s32.totalorder %s36, 0
      %s39 = sadd.s32 %s38, 1
      %s40 = scalar_select %p37, %s38, %s39
      %p43 = pneg %p37
      %p44 = scmp.eq.s32.totalorder %s28, 1
      %p45 = por %p43, %p44
      %p46 = scmp.ne.s32.totalorder %s38, %s41
      %p47 = scmp.eq.s32.totalorder %s28, 0
      %p48 = por %p46, %p47
      %p49 = scmp.ne.s32.totalorder %s38, %s41
      %p50 = scmp.eq.s32.totalorder %s33, 1
      %p51 = por %p49, %p50
      %p52 = scmp.ne.s32.totalorder %s41, %s42
      %p53 = scmp.eq.s32.totalorder %s33, 0
      %p54 = por %p52, %p53
      %p55 = scmp.ne.s32.totalorder %s41, %s42
      %p56 = scmp.eq.s32.totalorder %s34, 1
      %p57 = por %p55, %p56
      %p59 = scmp.ne.s32.totalorder %s42, %s58
      %p60 = scmp.eq.s32.totalorder %s34, 0
      %p61 = por %p59, %p60
      %s62 = ssub.s32 %s28, %s35
      %p63 = scmp.eq.s32.totalorder %s62, 0
      %s65 = sadd.s32 %s64, 1
      %s66 = scalar_select %p63, %s64, %s65
      %p69 = pneg %p63
      %p70 = scmp.eq.s32.totalorder %s28, 1
      %p71 = por %p69, %p70
      %p72 = scmp.ne.s32.totalorder %s64, %s67
      %p73 = scmp.eq.s32.totalorder %s28, 0
      %p74 = por %p72, %p73
      %p75 = scmp.ne.s32.totalorder %s64, %s67
      %p76 = scmp.eq.s32.totalorder %s33, 1
      %p77 = por %p75, %p76
      %p78 = scmp.ne.s32.totalorder %s67, %s68
      %p79 = scmp.eq.s32.totalorder %s33, 0
      %p80 = por %p78, %p79
      %p81 = scmp.ne.s32.totalorder %s67, %s68
      %p82 = scmp.eq.s32.totalorder %s34, 1
      %p83 = por %p81, %p82
      %p85 = scmp.ne.s32.totalorder %s68, %s84
      %p86 = scmp.eq.s32.totalorder %s34, 0
      %p87 = por %p85, %p86
      %s88 = ssub.s32 %s28, %s35
      %p89 = scmp.eq.s32.totalorder %s88, 0
      %s91 = sadd.s32 %s90, 1
      %s92 = scalar_select %p89, %s90, %s91
      %p95 = pneg %p89
      %p96 = scmp.eq.s32.totalorder %s28, 1
      %p97 = por %p95, %p96
      %p98 = scmp.ne.s32.totalorder %s90, %s93
      %p99 = scmp.eq.s32.totalorder %s28, 0
      %p100 = por %p98, %p99
      %p101 = scmp.ne.s32.totalorder %s90, %s93
      %p102 = scmp.eq.s32.totalorder %s33, 1
      %p103 = por %p101, %p102
      %p104 = scmp.ne.s32.totalorder %s93, %s94
      %p105 = scmp.eq.s32.totalorder %s33, 0
      %p106 = por %p104, %p105
      %p107 = scmp.ne.s32.totalorder %s93, %s94
      %p108 = scmp.eq.s32.totalorder %s34, 1
      %p109 = por %p107, %p108
      %p111 = scmp.ne.s32.totalorder %s94, %s110
      %p112 = scmp.eq.s32.totalorder %s34, 0
      %p113 = por %p111, %p112
      %s115 = sadd.s32 %s114, 1
      %p118 = scmp.eq.s32.totalorder %s28, 1
      %p119 = scmp.ne.s32.totalorder %s114, %s116
      %p120 = scmp.eq.s32.totalorder %s28, 0
      %p121 = por %p119, %p120
      %p122 = scmp.ne.s32.totalorder %s114, %s116
      %p123 = scmp.eq.s32.totalorder %s33, 1
      %p124 = por %p122, %p123
      %p125 = scmp.ne.s32.totalorder %s116, %s117
      %p126 = scmp.eq.s32.totalorder %s33, 0
      %p127 = por %p125, %p126
      %p128 = scmp.ne.s32.totalorder %s116, %s117
      %p129 = scmp.eq.s32.totalorder %s34, 1
      %p130 = por %p128, %p129
      %p132 = scmp.ne.s32.totalorder %s117, %s131
      %p133 = scmp.eq.s32.totalorder %s34, 0
      %p134 = por %p132, %p133
      %s136 = sadd.s32 %s135, 1
      %p139 = scmp.eq.s32.totalorder %s28, 1
      %p140 = scmp.ne.s32.totalorder %s135, %s137
      %p141 = scmp.eq.s32.totalorder %s28, 0
      %p142 = por %p140, %p141
      %p143 = scmp.ne.s32.totalorder %s135, %s137
      %p144 = scmp.eq.s32.totalorder %s33, 1
      %p145 = por %p143, %p144
      %p146 = scmp.ne.s32.totalorder %s137, %s138
      %p147 = scmp.eq.s32.totalorder %s33, 0
      %p148 = por %p146, %p147
      %p149 = scmp.ne.s32.totalorder %s137, %s138
      %p150 = scmp.eq.s32.totalorder %s34, 1
      %p151 = por %p149, %p150
      %p153 = scmp.ne.s32.totalorder %s138, %s152
      %p154 = scmp.eq.s32.totalorder %s34, 0
      %p155 = por %p153, %p154
      %s157 = sadd.s32 %s156, 1
      %p160 = scmp.eq.s32.totalorder %s28, 1
      %p161 = scmp.ne.s32.totalorder %s156, %s158
      %p162 = scmp.eq.s32.totalorder %s28, 0
      %p163 = por %p161, %p162
      %p164 = scmp.ne.s32.totalorder %s156, %s158
      %p165 = scmp.eq.s32.totalorder %s33, 1
      %p166 = por %p164, %p165
      %p167 = scmp.ne.s32.totalorder %s158, %s159
      %p168 = scmp.eq.s32.totalorder %s33, 0
      %p169 = por %p167, %p168
      %p170 = scmp.ne.s32.totalorder %s158, %s159
      %p171 = scmp.eq.s32.totalorder %s34, 1
      %p172 = por %p170, %p171
      %p174 = scmp.ne.s32.totalorder %s159, %s173
      %p175 = scmp.eq.s32.totalorder %s34, 0
      %p176 = por %p174, %p175
      %s178 = sadd.s32 %s177, 1
      %p181 = scmp.eq.s32.totalorder %s28, 1
      %p182 = scmp.ne.s32.totalorder %s177, %s179
      %p183 = scmp.eq.s32.totalorder %s28, 0
      %p184 = por %p182, %p183
      %p185 = scmp.ne.s32.totalorder %s177, %s179
      %p186 = scmp.eq.s32.totalorder %s33, 1
      %p187 = por %p185, %p186
      %p188 = scmp.ne.s32.totalorder %s179, %s180
      %p189 = scmp.eq.s32.totalorder %s33, 0
      %p190 = por %p188, %p189
      %p191 = scmp.ne.s32.totalorder %s179, %s180
      %p192 = scmp.eq.s32.totalorder %s34, 1
      %p193 = por %p191, %p192
      %p195 = scmp.ne.s32.totalorder %s180, %s194
      %p196 = scmp.eq.s32.totalorder %s34, 0
      %p197 = por %p195, %p196
      %s199 = sadd.s32 %s198, 1
      %p202 = scmp.eq.s32.totalorder %s28, 1
      %p203 = scmp.ne.s32.totalorder %s198, %s200
      %p204 = scmp.eq.s32.totalorder %s28, 0
      %p205 = por %p203, %p204
      %p206 = scmp.ne.s32.totalorder %s198, %s200
      %p207 = scmp.eq.s32.totalorder %s33, 1
      %p208 = por %p206, %p207
      %p209 = scmp.ne.s32.totalorder %s200, %s201
      %p210 = scmp.eq.s32.totalorder %s33, 0
      %p211 = por %p209, %p210
      %p212 = scmp.ne.s32.totalorder %s200, %s201
      %p213 = scmp.eq.s32.totalorder %s34, 1
      %p214 = por %p212, %p213
      %p216 = scmp.ne.s32.totalorder %s201, %s215
      %p217 = scmp.eq.s32.totalorder %s34, 0
      %p218 = por %p216, %p217
      %s220 = sadd.s32 %s219, 1
      %p223 = scmp.eq.s32.totalorder %s28, 1
      %p224 = scmp.ne.s32.totalorder %s219, %s221
      %p225 = scmp.eq.s32.totalorder %s28, 0
      %p226 = por %p224, %p225
      %p227 = scmp.ne.s32.totalorder %s219, %s221
      %p228 = scmp.eq.s32.totalorder %s33, 1
      %p229 = por %p227, %p228
      %p230 = scmp.ne.s32.totalorder %s221, %s222
      %p231 = scmp.eq.s32.totalorder %s33, 0
      %p232 = por %p230, %p231
      %p233 = scmp.ne.s32.totalorder %s221, %s222
      %p234 = scmp.eq.s32.totalorder %s34, 1
      %p235 = por %p233, %p234
      %p237 = scmp.ne.s32.totalorder %s222, %s236
      %p238 = scmp.eq.s32.totalorder %s34, 0
      %p239 = por %p237, %p238
      %s241 = sadd.s32 %s240, 1
      %p244 = scmp.eq.s32.totalorder %s28, 1
      %p245 = scmp.ne.s32.totalorder %s240, %s242
      %p246 = scmp.eq.s32.totalorder %s28, 0
      %p247 = por %p245, %p246
      %p248 = scmp.ne.s32.totalorder %s240, %s242
      %p249 = scmp.eq.s32.totalorder %s33, 1
      %p250 = por %p248, %p249
      %p251 = scmp.ne.s32.totalorder %s242, %s243
      %p252 = scmp.eq.s32.totalorder %s33, 0
      %p253 = por %p251, %p252
      %p254 = scmp.ne.s32.totalorder %s242, %s243
      %p255 = scmp.eq.s32.totalorder %s34, 1
      %p256 = por %p254, %p255
      %p258 = scmp.ne.s32.totalorder %s243, %s257
      %p259 = scmp.eq.s32.totalorder %s34, 0
      %p260 = por %p258, %p259
      %s262 = sadd.s32 %s261, 1
      %p265 = scmp.eq.s32.totalorder %s28, 1
      %p266 = scmp.ne.s32.totalorder %s261, %s263
      %p267 = scmp.eq.s32.totalorder %s28, 0
      %p268 = por %p266, %p267
      %p269 = scmp.ne.s32.totalorder %s261, %s263
      %p270 = scmp.eq.s32.totalorder %s33, 1
      %p271 = por %p269, %p270
      %p272 = scmp.ne.s32.totalorder %s263, %s264
      %p273 = scmp.eq.s32.totalorder %s33, 0
      %p274 = por %p272, %p273
      %p275 = scmp.ne.s32.totalorder %s263, %s264
      %p276 = scmp.eq.s32.totalorder %s34, 1
      %p277 = por %p275, %p276
      %p279 = scmp.ne.s32.totalorder %s264, %s278
      %p280 = scmp.eq.s32.totalorder %s34, 0
      %p281 = por %p279, %p280
      %s282 = ssub.s32 %s28, %s35
      %p283 = scmp.eq.s32.totalorder %s282, 0
      %s285 = sadd.s32 %s284, 1
      %s286 = scalar_select %p283, %s284, %s285
      %p289 = pneg %p283
      %p290 = scmp.eq.s32.totalorder %s28, 1
      %p291 = por %p289, %p290
      %p292 = scmp.ne.s32.totalorder %s284, %s287
      %p293 = scmp.eq.s32.totalorder %s28, 0
      %p294 = por %p292, %p293
      %p295 = scmp.ne.s32.totalorder %s284, %s287
      %p296 = scmp.eq.s32.totalorder %s33, 1
      %p297 = por %p295, %p296
      %p298 = scmp.ne.s32.totalorder %s287, %s288
      %p299 = scmp.eq.s32.totalorder %s33, 0
      %p300 = por %p298, %p299
      %p301 = scmp.ne.s32.totalorder %s287, %s288
      %p302 = scmp.eq.s32.totalorder %s34, 1
      %p303 = por %p301, %p302
      %p305 = scmp.ne.s32.totalorder %s288, %s304
      %p306 = scmp.eq.s32.totalorder %s34, 0
      %p307 = por %p305, %p306
      %p308 = scmp.le.s32.totalorder 1, %s28
      %p309 = scmp.lt.s32.totalorder %s28, 3
      %p310 = pnand %p308, %p309
      %p311 = pneg %p310
      // Predicated region
      $region9: #{tpu_custom_call.1} parent=5 // pred_check
        _
      $region10: #{tpu_custom_call.1} parent=5 // pred_check_branch
        %313 = sbr.rel (%p310) target = $region12
      $region11: #{tpu_custom_call.1} parent=5 // pred_region
        %s314 = ssub.s32 %s28, 1
        // Predicated region
        $region13: #{tpu_custom_call.1} parent=11 // pred_check
          %p315 = pneg %p127
        $region14: #{tpu_custom_call.1} parent=11 // pred_check_branch
          %317 = sbr.rel (%p315) target = $region16
        $region15: #{tpu_custom_call.1} parent=11 // pred_region
          %319 = vsyncadd [#allocation9], 0
          %s320 = sshll.u32 %s3, 4
          %s321 = int_to_ptr.hbm [resolvable:$true] %s320
          %s322 = sshll.u32 [#allocation8], 4
          %s323 = int_to_ptr.vmem [resolvable:$true] %s322
          %328 = dma.hbm_to_vmem [thread:$0]  %s321, 256, %s323, [#allocation9], 64, 64, 4
        $region16: #{tpu_custom_call.1} parent=11 // pred_fallthru
          _
        // Predicated region
        $region17: #{tpu_custom_call.1} parent=11 // pred_check
          %p329 = pneg %p148
        $region18: #{tpu_custom_call.1} parent=11 // pred_check_branch
          %331 = sbr.rel (%p329) target = $region20
        $region19: #{tpu_custom_call.1} parent=11 // pred_region
          _
        $region20: #{tpu_custom_call.1} parent=11 // pred_fallthru
          _
        // Predicated region
        $region21: #{tpu_custom_call.1} parent=11 // pred_check
          %p332 = pneg %p169
        $region22: #{tpu_custom_call.1} parent=11 // pred_check_branch
          %334 = sbr.rel (%p332) target = $region24
        $region23: #{tpu_custom_call.1} parent=11 // pred_region
          %336 = vsyncadd [#allocation9], 0
          %s337 = sshll.u32 %s5, 4
          %s338 = int_to_ptr.hbm [resolvable:$true] %s337
          %s339 = sshll.u32 [#allocation10], 4
          %s340 = int_to_ptr.vmem [resolvable:$true] %s339
          %345 = dma.hbm_to_vmem [thread:$0]  %s338, 256, %s340, [#allocation9], 64, 64, 4
        $region24: #{tpu_custom_call.1} parent=11 // pred_fallthru
          _
        // Predicated region
        $region25: #{tpu_custom_call.1} parent=11 // pred_check
          %p346 = pneg %p190
        $region26: #{tpu_custom_call.1} parent=11 // pred_check_branch
          %348 = sbr.rel (%p346) target = $region28
        $region27: #{tpu_custom_call.1} parent=11 // pred_region
          _
        $region28: #{tpu_custom_call.1} parent=11 // pred_fallthru
          _
        // Predicated region
        $region29: #{tpu_custom_call.1} parent=11 // pred_check
          %p349 = pneg %p211
        $region30: #{tpu_custom_call.1} parent=11 // pred_check_branch
          %351 = sbr.rel (%p349) target = $region32
        $region31: #{tpu_custom_call.1} parent=11 // pred_region
          %353 = vsyncadd [#allocation12], 0
          %s354 = sshll.u32 %s7, 4
          %s355 = int_to_ptr.hbm [resolvable:$true] %s354
          %s356 = sshll.u32 [#allocation11], 4
          %s357 = int_to_ptr.vmem [resolvable:$true] %s356
          %362 = dma.hbm_to_vmem [thread:$0]  %s355, 256, %s357, [#allocation12], 64, 64, 4
        $region32: #{tpu_custom_call.1} parent=11 // pred_fallthru
          _
        // Predicated region
        $region33: #{tpu_custom_call.1} parent=11 // pred_check
          %p363 = pneg %p232
        $region34: #{tpu_custom_call.1} parent=11 // pred_check_branch
          %365 = sbr.rel (%p363) target = $region36
        $region35: #{tpu_custom_call.1} parent=11 // pred_region
          _
        $region36: #{tpu_custom_call.1} parent=11 // pred_fallthru
          _
        // Predicated region
        $region37: #{tpu_custom_call.1} parent=11 // pred_check
          %p366 = pneg %p253
        $region38: #{tpu_custom_call.1} parent=11 // pred_check_branch
          %368 = sbr.rel (%p366) target = $region40
        $region39: #{tpu_custom_call.1} parent=11 // pred_region
          %370 = vsyncadd [#allocation12], 0
          %s371 = sshll.u32 %s9, 4
          %s372 = int_to_ptr.hbm [resolvable:$true] %s371
          %s373 = sshll.u32 [#allocation13], 4
          %s374 = int_to_ptr.vmem [resolvable:$true] %s373
          %379 = dma.hbm_to_vmem [thread:$0]  %s372, 256, %s374, [#allocation12], 64, 64, 4
        $region40: #{tpu_custom_call.1} parent=11 // pred_fallthru
          _
        // Predicated region
        $region41: #{tpu_custom_call.1} parent=11 // pred_check
          %p380 = pneg %p274
        $region42: #{tpu_custom_call.1} parent=11 // pred_check_branch
          %382 = sbr.rel (%p380) target = $region44
        $region43: #{tpu_custom_call.1} parent=11 // pred_region
          _
        $region44: #{tpu_custom_call.1} parent=11 // pred_fallthru
          _
      $region12: #{tpu_custom_call.1} parent=5 // pred_fallthru
        _
      %p383 = scmp.lt.s32.totalorder %s28, 2
      // Predicated region
      $region45: #{tpu_custom_call.1} parent=5 // pred_check
        %p384 = pneg %p383
      $region46: #{tpu_custom_call.1} parent=5 // pred_check_branch
        %386 = sbr.rel (%p384) target = $region48
      $region47: #{tpu_custom_call.1} parent=5 // pred_region
        // Predicated region
        $region49: #{tpu_custom_call.1} parent=47 // pred_check
          %p387 = pneg %p48
        $region50: #{tpu_custom_call.1} parent=47 // pred_check_branch
          %389 = sbr.rel (%p387) target = $region52
        $region51: #{tpu_custom_call.1} parent=47 // pred_region
          %s390 = sand.u32 %s38, 1
          %s391 = scalar_lea.sflag [#allocation3], %s390
          %s392 = sand.u32 %s38, 1
          %s393 = smul.addr %s392, 4
          %s394 = scalar_lea.vmem [#allocation2], %s393
          %396 = vsyncadd %s391, 0
          %s397 = smul.addr %s28, 4
          %s398 = scalar_lea.hbm %s0, %s397
          %s400 = sshll.u32 %s398, 4
          %s401 = int_to_ptr.hbm [resolvable:$true] %s400
          %s402 = sshll.u32 %s394, 4
          %s403 = int_to_ptr.vmem [resolvable:$true] %s402
          %405 = dma.hbm_to_vmem [thread:$0]  %s401, 64, %s403, %s391
        $region52: #{tpu_custom_call.1} parent=47 // pred_fallthru
          _
        // Predicated region
        $region53: #{tpu_custom_call.1} parent=47 // pred_check
          %p406 = pneg %p74
        $region54: #{tpu_custom_call.1} parent=47 // pred_check_branch
          %408 = sbr.rel (%p406) target = $region56
        $region55: #{tpu_custom_call.1} parent=47 // pred_region
          %s409 = sand.u32 %s28, 1
          %s410 = scalar_lea.sflag [#allocation6], %s409
          %s411 = sand.u32 %s64, 1
          %s412 = smul.addr %s411, 4
          %s413 = scalar_lea.vmem [#allocation5], %s412
          %415 = vsyncadd %s410, 0
          %s416 = smul.addr %s28, 4
          %s417 = scalar_lea.hbm %s1, %s416
          %s419 = sshll.u32 %s417, 4
          %s420 = int_to_ptr.hbm [resolvable:$true] %s419
          %s421 = sshll.u32 %s413, 4
          %s422 = int_to_ptr.vmem [resolvable:$true] %s421
          %424 = dma.hbm_to_vmem [thread:$0]  %s420, 64, %s422, %s410
        $region56: #{tpu_custom_call.1} parent=47 // pred_fallthru
          _
        // Predicated region
        $region57: #{tpu_custom_call.1} parent=47 // pred_check
          %p425 = pneg %p100
        $region58: #{tpu_custom_call.1} parent=47 // pred_check_branch
          %427 = sbr.rel (%p425) target = $region60
        $region59: #{tpu_custom_call.1} parent=47 // pred_region
          %s428 = sand.u32 %s28, 1
          %s429 = scalar_lea.sflag [#allocation6], %s428
          %s430 = sand.u32 %s90, 1
          %s431 = smul.addr %s430, 4
          %s432 = scalar_lea.vmem [#allocation7], %s431
          %434 = vsyncadd %s429, 0
          %s435 = smul.addr %s28, 4
          %s436 = scalar_lea.hbm %s2, %s435
          %s438 = sshll.u32 %s436, 4
          %s439 = int_to_ptr.hbm [resolvable:$true] %s438
          %s440 = sshll.u32 %s432, 4
          %s441 = int_to_ptr.vmem [resolvable:$true] %s440
          %443 = dma.hbm_to_vmem [thread:$0]  %s439, 64, %s441, %s429
        $region60: #{tpu_custom_call.1} parent=47 // pred_fallthru
          _
      $region48: #{tpu_custom_call.1} parent=5 // pred_fallthru
        _
      %p444 = scmp.le.s32.totalorder 1, %s28
      %p445 = scmp.lt.s32.totalorder %s28, 3
      %p446 = pnand %p444, %p445
      %p447 = pneg %p446
      // Predicated region
      $region61: #{tpu_custom_call.1} parent=5 // pred_check
        _
      $region62: #{tpu_custom_call.1} parent=5 // pred_check_branch
        %449 = sbr.rel (%p446) target = $region64
      $region63: #{tpu_custom_call.1} parent=5 // pred_region
        %s450 = ssub.s32 %s28, 1
        %s451 = sand.u32 %s41, 1
        %s452 = scalar_lea.sflag [#allocation3], %s451
        %s453 = sand.u32 %s41, 1
        %s454 = smul.addr %s453, 4
        %s455 = scalar_lea.vmem [#allocation2], %s454
        // Predicated region
        $region65: #{tpu_custom_call.1} parent=63 // pred_check
          %p456 = pneg %p54
        $region66: #{tpu_custom_call.1} parent=63 // pred_check_branch
          %458 = sbr.rel (%p456) target = $region68
        $region67: #{tpu_custom_call.1} parent=63 // pred_region
          %460 = dma.done %s452, 64
        $region68: #{tpu_custom_call.1} parent=63 // pred_fallthru
          _
        %s461 = sand.u32 %s33, 1
        %s462 = scalar_lea.sflag [#allocation6], %s461
        %s463 = sand.u32 %s67, 1
        %s464 = smul.addr %s463, 4
        %s465 = scalar_lea.vmem [#allocation5], %s464
        // Predicated region
        $region69: #{tpu_custom_call.1} parent=63 // pred_check
          %p466 = pneg %p80
        $region70: #{tpu_custom_call.1} parent=63 // pred_check_branch
          %468 = sbr.rel (%p466) target = $region72
        $region71: #{tpu_custom_call.1} parent=63 // pred_region
          %470 = dma.done %s462, 64
        $region72: #{tpu_custom_call.1} parent=63 // pred_fallthru
          _
        %s471 = sand.u32 %s33, 1
        %s472 = scalar_lea.sflag [#allocation6], %s471
        %s473 = sand.u32 %s93, 1
        %s474 = smul.addr %s473, 4
        %s475 = scalar_lea.vmem [#allocation7], %s474
        // Predicated region
        $region73: #{tpu_custom_call.1} parent=63 // pred_check
          %p476 = pneg %p106
        $region74: #{tpu_custom_call.1} parent=63 // pred_check_branch
          %478 = sbr.rel (%p476) target = $region76
        $region75: #{tpu_custom_call.1} parent=63 // pred_region
          %480 = dma.done %s472, 64
        $region76: #{tpu_custom_call.1} parent=63 // pred_fallthru
          _
        // Predicated region
        $region77: #{tpu_custom_call.1} parent=63 // pred_check
          %p481 = pneg %p127
        $region78: #{tpu_custom_call.1} parent=63 // pred_check_branch
          %483 = sbr.rel (%p481) target = $region80
        $region79: #{tpu_custom_call.1} parent=63 // pred_region
          %485 = dma.done [#allocation9], 256
        $region80: #{tpu_custom_call.1} parent=63 // pred_fallthru
          _
        // Predicated region
        $region81: #{tpu_custom_call.1} parent=63 // pred_check
          %p486 = pneg %p169
        $region82: #{tpu_custom_call.1} parent=63 // pred_check_branch
          %488 = sbr.rel (%p486) target = $region84
        $region83: #{tpu_custom_call.1} parent=63 // pred_region
          %490 = dma.done [#allocation9], 256
        $region84: #{tpu_custom_call.1} parent=63 // pred_fallthru
          _
        // Predicated region
        $region85: #{tpu_custom_call.1} parent=63 // pred_check
          %p491 = pneg %p211
        $region86: #{tpu_custom_call.1} parent=63 // pred_check_branch
          %493 = sbr.rel (%p491) target = $region88
        $region87: #{tpu_custom_call.1} parent=63 // pred_region
          %495 = dma.done [#allocation12], 256
        $region88: #{tpu_custom_call.1} parent=63 // pred_fallthru
          _
        // Predicated region
        $region89: #{tpu_custom_call.1} parent=63 // pred_check
          %p496 = pneg %p253
        $region90: #{tpu_custom_call.1} parent=63 // pred_check_branch
          %498 = sbr.rel (%p496) target = $region92
        $region91: #{tpu_custom_call.1} parent=63 // pred_region
          %500 = dma.done [#allocation12], 256
        $region92: #{tpu_custom_call.1} parent=63 // pred_fallthru
          _
        %s501 = sand.u32 %s41, 1
        %s502 = scalar_lea.sflag [#allocation3], %s501
        %s503 = sand.u32 %s41, 1
        %s504 = smul.addr %s503, 4
        %s505 = scalar_lea.vmem [#allocation2], %s504
        %p506 = pneg %p54
        %p507 = pneg %p51
        %s508 = sand.u32 %s33, 1
        %s509 = scalar_lea.sflag [#allocation6], %s508
        %s510 = sand.u32 %s67, 1
        %s511 = smul.addr %s510, 4
        %s512 = scalar_lea.vmem [#allocation5], %s511
        %p513 = pneg %p80
        %p514 = pneg %p77
        %s515 = sand.u32 %s33, 1
        %s516 = scalar_lea.sflag [#allocation6], %s515
        %s517 = sand.u32 %s93, 1
        %s518 = smul.addr %s517, 4
        %s519 = scalar_lea.vmem [#allocation7], %s518
        %p520 = pneg %p106
        %p521 = pneg %p103
        %p522 = pneg %p127
        %p523 = pneg %p124
        %p524 = pneg %p148
        %p525 = pneg %p145
        %p526 = pneg %p169
        %p527 = pneg %p166
        %p528 = pneg %p190
        %p529 = pneg %p187
        %p530 = pneg %p211
        %p531 = pneg %p208
        %p532 = pneg %p232
        %p533 = pneg %p229
        %p534 = pneg %p253
        %p535 = pneg %p250
        %p536 = pneg %p274
        %p537 = pneg %p271
        %p538 = pneg %p300
        %p539 = pneg %p297
        %s540 = sand.u32 %s287, 1
        %s541 = scalar_lea.sflag [#allocation4], %s540
        %s542 = sand.u32 %s287, 1
        %s543 = smul.addr %s542, 8
        %s544 = scalar_lea.vmem [#allocation14], %s543
        %v546 = vld [vmem:[%s455] sm:$0xf]
        %v547 = vld [vmem:[%s465] sm:$0xf]
        %v548 = vld [vmem:[%s475] sm:$0xf]
        %v549 = vld [vmem:[#allocation8] sm:$0xf]
        %v550 = vld [vmem:[#allocation8 + $0x4] sm:$0xf]
        %v551 = vld [vmem:[#allocation8 + $0x8] sm:$0xf]
        %v552 = vld [vmem:[#allocation8 + $0xc] sm:$0xf]
        %v553 = vld [vmem:[%s4] sm:$0x1]
        %v555 = vperm.slane %v553, 0
        %v561 = vunpack.c.l.b16 %v549
        %v562 = vunpack.c.l.b16 %v550
        %v563 = vunpack.c.l.b16 %v551
        %v564 = vunpack.c.l.b16 %v552
        %v565 = vpack.c.b16 %v562, %v561
        %v566 = vpack.c.b16 %v564, %v563
        %vm569 = vcmask 261120
        %v571 = vsel %vm569, %v546, 0
        %573 = vmatpush.bf16.msra.mxu0 0
        %574 = vmatpush.bf16.msra.mxu0 0
        %575 = vmatpush.bf16.msra.mxu0 0
        %576 = vmatpush.bf16.msra.mxu0 0
        %577 = vmatpush.bf16.msra.mxu0 0
        %578 = vmatpush.bf16.msra.mxu0 0
        %579 = vmatpush.bf16.msra.mxu0 %v566
        %580 = vmatpush.bf16.msra.mxu0 %v565
        %581 = vmatmul.bf16.gmra.mxu0 %v571
        %v582 = vpop.f32.mrf.mxu0
        %v583 = vadd.f32 %v555, %v582
        %v584 = vpop.f32.mrf.mxu0
        %585 = vdwg.mxu0
        %v586 = vld [vmem:[#allocation10] sm:$0xf]
        %v587 = vld [vmem:[#allocation10 + $0x4] sm:$0xf]
        %v588 = vld [vmem:[#allocation10 + $0x8] sm:$0xf]
        %v589 = vld [vmem:[#allocation10 + $0xc] sm:$0xf]
        %v590 = vld [vmem:[%s6] sm:$0x1]
        %v592 = vperm.slane %v590, 0
        %v598 = vunpack.c.l.b16 %v586
        %v599 = vunpack.c.l.b16 %v587
        %v600 = vunpack.c.l.b16 %v588
        %v601 = vunpack.c.l.b16 %v589
        %v602 = vpack.c.b16 %v599, %v598
        %v603 = vpack.c.b16 %v601, %v600
        %v607 = vsel %vm569, %v547, 0
        %609 = vmatpush.bf16.msra.mxu0 0
        %610 = vmatpush.bf16.msra.mxu0 0
        %611 = vmatpush.bf16.msra.mxu0 0
        %612 = vmatpush.bf16.msra.mxu0 0
        %613 = vmatpush.bf16.msra.mxu0 0
        %614 = vmatpush.bf16.msra.mxu0 0
        %615 = vmatpush.bf16.msra.mxu0 %v603
        %616 = vmatpush.bf16.msra.mxu0 %v602
        %617 = vmatmul.bf16.gmra.mxu0 %v607
        %v618 = vpop.f32.mrf.mxu0
        %v619 = vadd.f32 %v592, %v618
        %v620 = vpop.f32.mrf.mxu0
        %621 = vdwg.mxu0
        %v622 = vld [vmem:[#allocation11] sm:$0xf]
        %v623 = vld [vmem:[#allocation11 + $0x4] sm:$0xf]
        %v624 = vld [vmem:[#allocation11 + $0x8] sm:$0xf]
        %v625 = vld [vmem:[#allocation11 + $0xc] sm:$0xf]
        %v626 = vld [vmem:[%s8] sm:$0x1]
        %v628 = vperm.slane %v626, 0
        %v634 = vunpack.c.l.b16 %v622
        %v635 = vunpack.c.l.b16 %v623
        %v636 = vunpack.c.l.b16 %v624
        %v637 = vunpack.c.l.b16 %v625
        %v638 = vpack.c.b16 %v635, %v634
        %v639 = vpack.c.b16 %v637, %v636
        %v643 = vsel %vm569, %v548, 0
        %645 = vmatpush.bf16.msra.mxu0 0
        %646 = vmatpush.bf16.msra.mxu0 0
        %647 = vmatpush.bf16.msra.mxu0 0
        %648 = vmatpush.bf16.msra.mxu0 0
        %649 = vmatpush.bf16.msra.mxu0 0
        %650 = vmatpush.bf16.msra.mxu0 0
        %651 = vmatpush.bf16.msra.mxu0 %v639
        %652 = vmatpush.bf16.msra.mxu0 %v638
        %653 = vmatmul.bf16.gmra.mxu0 %v643
        %v654 = vpop.f32.mrf.mxu0
        %v655 = vadd.f32 %v628, %v654
        %v656 = vpop.f32.mrf.mxu0
        %657 = vdwg.mxu0
        %659 = vrot.lane.b32.xlu0 %v583, 120
        %v660 = vpop.permute.xlu0 %659
        %662 = vrot.lane.b32.xlu0 %v583, 112
        %v663 = vpop.permute.xlu0 %662
        %665 = vrot.lane.b32.xlu0 %v583, 104
        %v666 = vpop.permute.xlu0 %665
        %v668 = vrot.slane %v663, 4
        %vm669 = vcmask 1047556
        %v670 = vsel %vm669, %v668, %v583
        %v671 = vrot.slane %v583, 4
        %v672 = vsel %vm669, %v663, %v671
        %v674 = vunpack.c.l.s4 1983009808
        %v675 = vunpack.c.0.s8 %v674
        %v676 = vperm.slane %v670, %v675
        %v678 = vunpack.c.l.s4 1983009808
        %v679 = vunpack.c.0.s8 %v678
        %v680 = vperm.slane %v672, %v679
        %v681 = vrot.slane %v666, 4
        %v682 = vsel %vm669, %v681, %v660
        %v683 = vrot.slane %v660, 4
        %v684 = vsel %vm669, %v666, %v683
        %v686 = vunpack.c.l.s4 1983009808
        %v687 = vunpack.c.0.s8 %v686
        %v688 = vperm.slane %v682, %v687
        %v690 = vunpack.c.l.s4 1983009808
        %v691 = vunpack.c.0.s8 %v690
        %v692 = vperm.slane %v684, %v691
        %v693 = vrot.slane %v688, 4
        %v694 = vsel %vm669, %v693, %v676
        %v695 = vrot.slane %v676, 4
        %v696 = vsel %vm669, %v688, %v695
        %v698 = vunpack.c.l.s4 1934713408
        %v699 = vunpack.c.0.s8 %v698
        %v700 = vperm.slane %v694, %v699
        %v702 = vunpack.c.l.s4 1934713408
        %v703 = vunpack.c.0.s8 %v702
        %v704 = vperm.slane %v696, %v703
        %v705 = vrot.slane %v692, 4
        %v706 = vsel %vm669, %v705, %v680
        %v707 = vrot.slane %v680, 4
        %v708 = vsel %vm669, %v692, %v707
        %v710 = vunpack.c.l.s4 1934713408
        %v711 = vunpack.c.0.s8 %v710
        %v712 = vperm.slane %v706, %v711
        %v714 = vunpack.c.l.s4 1934713408
        %v715 = vunpack.c.0.s8 %v714
        %v716 = vperm.slane %v708, %v715
        %v717 = vrot.slane %v700, 4
        %v718 = vsel %vm669, 0.0, %v717
        %v719 = vrot.slane %v704, 4
        %v720 = vsel %vm669, 0.0, %v719
        %v721 = vrot.slane %v712, 4
        %v722 = vsel %vm669, 0.0, %v721
        %v723 = vrot.slane %v716, 4
        %v724 = vsel %vm669, 0.0, %v723
        %v725 = vsel %vm669, %v719, %v700
        %v727 = vunpack.c.l.s4 1983009808
        %v728 = vunpack.c.0.s8 %v727
        %v729 = vperm.slane %v725, %v728
        %v730 = vrot.slane %v720, 4
        %v731 = vsel %vm669, %v730, %v718
        %v733 = vunpack.c.l.s4 1983009808
        %v734 = vunpack.c.0.s8 %v733
        %v735 = vperm.slane %v731, %v734
        %v736 = vsel %vm669, %v723, %v712
        %v738 = vunpack.c.l.s4 1983009808
        %v739 = vunpack.c.0.s8 %v738
        %v740 = vperm.slane %v736, %v739
        %v741 = vrot.slane %v724, 4
        %v742 = vsel %vm669, %v741, %v722
        %v744 = vunpack.c.l.s4 1983009808
        %v745 = vunpack.c.0.s8 %v744
        %v746 = vperm.slane %v742, %v745
        %v747 = vrot.slane %v735, 4
        %v748 = vsel %vm669, %v747, %v729
        %v749 = vrot.slane %v729, 4
        %v750 = vsel %vm669, %v735, %v749
        %v752 = vunpack.c.l.s4 1934713408
        %v753 = vunpack.c.0.s8 %v752
        %v754 = vperm.slane %v748, %v753
        %v756 = vunpack.c.l.s4 1934713408
        %v757 = vunpack.c.0.s8 %v756
        %v758 = vperm.slane %v750, %v757
        %v759 = vrot.slane %v746, 4
        %v760 = vsel %vm669, %v759, %v740
        %v761 = vrot.slane %v740, 4
        %v762 = vsel %vm669, %v746, %v761
        %v764 = vunpack.c.l.s4 1934713408
        %v765 = vunpack.c.0.s8 %v764
        %v766 = vperm.slane %v760, %v765
        %v768 = vunpack.c.l.s4 1934713408
        %v769 = vunpack.c.0.s8 %v768
        %v770 = vperm.slane %v762, %v769
        %v771 = vrot.slane %v766, 4
        %v772 = vsel %vm669, %v771, %v754
        %v773 = vrot.slane %v754, 4
        %v774 = vsel %vm669, %v766, %v773
        %v775 = vrot.slane %v770, 4
        %v776 = vsel %vm669, %v775, %v758
        %v777 = vrot.slane %v758, 4
        %v778 = vsel %vm669, %v770, %v777
        %v779 = vpack.c.bf16 %v772, %v772
        %v780 = vpack.c.bf16 %v774, %v774
        %v781 = vpack.c.bf16 %v776, %v776
        %v782 = vpack.c.bf16 %v778, %v778
        %784 = vrot.lane.b32.xlu0 %v619, 120
        %v785 = vpop.permute.xlu0 %784
        %787 = vrot.lane.b32.xlu0 %v619, 112
        %v788 = vpop.permute.xlu0 %787
        %790 = vrot.lane.b32.xlu0 %v619, 104
        %v791 = vpop.permute.xlu0 %790
        %v793 = vrot.slane %v788, 4
        %v794 = vsel %vm669, %v793, %v619
        %v795 = vrot.slane %v619, 4
        %v796 = vsel %vm669, %v788, %v795
        %v798 = vunpack.c.l.s4 1983009808
        %v799 = vunpack.c.0.s8 %v798
        %v800 = vperm.slane %v794, %v799
        %v802 = vunpack.c.l.s4 1983009808
        %v803 = vunpack.c.0.s8 %v802
        %v804 = vperm.slane %v796, %v803
        %v805 = vrot.slane %v791, 4
        %v806 = vsel %vm669, %v805, %v785
        %v807 = vrot.slane %v785, 4
        %v808 = vsel %vm669, %v791, %v807
        %v810 = vunpack.c.l.s4 1983009808
        %v811 = vunpack.c.0.s8 %v810
        %v812 = vperm.slane %v806, %v811
        %v814 = vunpack.c.l.s4 1983009808
        %v815 = vunpack.c.0.s8 %v814
        %v816 = vperm.slane %v808, %v815
        %v817 = vrot.slane %v812, 4
        %v818 = vsel %vm669, %v817, %v800
        %v819 = vrot.slane %v800, 4
        %v820 = vsel %vm669, %v812, %v819
        %v822 = vunpack.c.l.s4 1934713408
        %v823 = vunpack.c.0.s8 %v822
        %v824 = vperm.slane %v818, %v823
        %v826 = vunpack.c.l.s4 1934713408
        %v827 = vunpack.c.0.s8 %v826
        %v828 = vperm.slane %v820, %v827
        %v829 = vrot.slane %v816, 4
        %v830 = vsel %vm669, %v829, %v804
        %v831 = vrot.slane %v804, 4
        %v832 = vsel %vm669, %v816, %v831
        %v834 = vunpack.c.l.s4 1934713408
        %v835 = vunpack.c.0.s8 %v834
        %v836 = vperm.slane %v830, %v835
        %v838 = vunpack.c.l.s4 1934713408
        %v839 = vunpack.c.0.s8 %v838
        %v840 = vperm.slane %v832, %v839
        %v841 = vrot.slane %v824, 4
        %v842 = vsel %vm669, 0.0, %v841
        %v843 = vrot.slane %v828, 4
        %v844 = vsel %vm669, 0.0, %v843
        %v845 = vrot.slane %v836, 4
        %v846 = vsel %vm669, 0.0, %v845
        %v847 = vrot.slane %v840, 4
        %v848 = vsel %vm669, 0.0, %v847
        %v849 = vsel %vm669, %v843, %v824
        %v851 = vunpack.c.l.s4 1983009808
        %v852 = vunpack.c.0.s8 %v851
        %v853 = vperm.slane %v849, %v852
        %v854 = vrot.slane %v844, 4
        %v855 = vsel %vm669, %v854, %v842
        %v857 = vunpack.c.l.s4 1983009808
        %v858 = vunpack.c.0.s8 %v857
        %v859 = vperm.slane %v855, %v858
        %v860 = vsel %vm669, %v847, %v836
        %v862 = vunpack.c.l.s4 1983009808
        %v863 = vunpack.c.0.s8 %v862
        %v864 = vperm.slane %v860, %v863
        %v865 = vrot.slane %v848, 4
        %v866 = vsel %vm669, %v865, %v846
        %v868 = vunpack.c.l.s4 1983009808
        %v869 = vunpack.c.0.s8 %v868
        %v870 = vperm.slane %v866, %v869
        %v871 = vrot.slane %v859, 4
        %v872 = vsel %vm669, %v871, %v853
        %v873 = vrot.slane %v853, 4
        %v874 = vsel %vm669, %v859, %v873
        %v876 = vunpack.c.l.s4 1934713408
        %v877 = vunpack.c.0.s8 %v876
        %v878 = vperm.slane %v872, %v877
        %v880 = vunpack.c.l.s4 1934713408
        %v881 = vunpack.c.0.s8 %v880
        %v882 = vperm.slane %v874, %v881
        %v883 = vrot.slane %v870, 4
        %v884 = vsel %vm669, %v883, %v864
        %v885 = vrot.slane %v864, 4
        %v886 = vsel %vm669, %v870, %v885
        %v888 = vunpack.c.l.s4 1934713408
        %v889 = vunpack.c.0.s8 %v888
        %v890 = vperm.slane %v884, %v889
        %v892 = vunpack.c.l.s4 1934713408
        %v893 = vunpack.c.0.s8 %v892
        %v894 = vperm.slane %v886, %v893
        %v895 = vrot.slane %v890, 4
        %v896 = vsel %vm669, %v895, %v878
        %v897 = vrot.slane %v878, 4
        %v898 = vsel %vm669, %v890, %v897
        %v899 = vrot.slane %v894, 4
        %v900 = vsel %vm669, %v899, %v882
        %v901 = vrot.slane %v882, 4
        %v902 = vsel %vm669, %v894, %v901
        %v903 = vpack.c.bf16 %v896, %v896
        %v904 = vpack.c.bf16 %v898, %v898
        %v905 = vpack.c.bf16 %v900, %v900
        %v906 = vpack.c.bf16 %v902, %v902
        %908 = vrot.lane.b32.xlu0 %v655, 120
        %v909 = vpop.permute.xlu0 %908
        %911 = vrot.lane.b32.xlu0 %v655, 112
        %v912 = vpop.permute.xlu0 %911
        %914 = vrot.lane.b32.xlu0 %v655, 104
        %v915 = vpop.permute.xlu0 %914
        %v917 = vrot.slane %v912, 4
        %v918 = vsel %vm669, %v917, %v655
        %v919 = vrot.slane %v655, 4
        %v920 = vsel %vm669, %v912, %v919
        %v922 = vunpack.c.l.s4 1983009808
        %v923 = vunpack.c.0.s8 %v922
        %v924 = vperm.slane %v918, %v923
        %v926 = vunpack.c.l.s4 1983009808
        %v927 = vunpack.c.0.s8 %v926
        %v928 = vperm.slane %v920, %v927
        %v929 = vrot.slane %v915, 4
        %v930 = vsel %vm669, %v929, %v909
        %v931 = vrot.slane %v909, 4
        %v932 = vsel %vm669, %v915, %v931
        %v934 = vunpack.c.l.s4 1983009808
        %v935 = vunpack.c.0.s8 %v934
        %v936 = vperm.slane %v930, %v935
        %v938 = vunpack.c.l.s4 1983009808
        %v939 = vunpack.c.0.s8 %v938
        %v940 = vperm.slane %v932, %v939
        %v941 = vrot.slane %v936, 4
        %v942 = vsel %vm669, %v941, %v924
        %v943 = vrot.slane %v924, 4
        %v944 = vsel %vm669, %v936, %v943
        %v946 = vunpack.c.l.s4 1934713408
        %v947 = vunpack.c.0.s8 %v946
        %v948 = vperm.slane %v942, %v947
        %v950 = vunpack.c.l.s4 1934713408
        %v951 = vunpack.c.0.s8 %v950
        %v952 = vperm.slane %v944, %v951
        %v953 = vrot.slane %v940, 4
        %v954 = vsel %vm669, %v953, %v928
        %v955 = vrot.slane %v928, 4
        %v956 = vsel %vm669, %v940, %v955
        %v958 = vunpack.c.l.s4 1934713408
        %v959 = vunpack.c.0.s8 %v958
        %v960 = vperm.slane %v954, %v959
        %v962 = vunpack.c.l.s4 1934713408
        %v963 = vunpack.c.0.s8 %v962
        %v964 = vperm.slane %v956, %v963
        %v965 = vrot.slane %v948, 4
        %v966 = vsel %vm669, 0.0, %v965
        %v967 = vrot.slane %v952, 4
        %v968 = vsel %vm669, 0.0, %v967
        %v969 = vrot.slane %v960, 4
        %v970 = vsel %vm669, 0.0, %v969
        %v971 = vrot.slane %v964, 4
        %v972 = vsel %vm669, 0.0, %v971
        %v973 = vsel %vm669, %v967, %v948
        %v975 = vunpack.c.l.s4 1983009808
        %v976 = vunpack.c.0.s8 %v975
        %v977 = vperm.slane %v973, %v976
        %v978 = vrot.slane %v968, 4
        %v979 = vsel %vm669, %v978, %v966
        %v981 = vunpack.c.l.s4 1983009808
        %v982 = vunpack.c.0.s8 %v981
        %v983 = vperm.slane %v979, %v982
        %v984 = vsel %vm669, %v971, %v960
        %v986 = vunpack.c.l.s4 1983009808
        %v987 = vunpack.c.0.s8 %v986
        %v988 = vperm.slane %v984, %v987
        %v989 = vrot.slane %v972, 4
        %v990 = vsel %vm669, %v989, %v970
        %v992 = vunpack.c.l.s4 1983009808
        %v993 = vunpack.c.0.s8 %v992
        %v994 = vperm.slane %v990, %v993
        %v995 = vrot.slane %v983, 4
        %v996 = vsel %vm669, %v995, %v977
        %v997 = vrot.slane %v977, 4
        %v998 = vsel %vm669, %v983, %v997
        %v1000 = vunpack.c.l.s4 1934713408
        %v1001 = vunpack.c.0.s8 %v1000
        %v1002 = vperm.slane %v996, %v1001
        %v1004 = vunpack.c.l.s4 1934713408
        %v1005 = vunpack.c.0.s8 %v1004
        %v1006 = vperm.slane %v998, %v1005
        %v1007 = vrot.slane %v994, 4
        %v1008 = vsel %vm669, %v1007, %v988
        %v1009 = vrot.slane %v988, 4
        %v1010 = vsel %vm669, %v994, %v1009
        %v1012 = vunpack.c.l.s4 1934713408
        %v1013 = vunpack.c.0.s8 %v1012
        %v1014 = vperm.slane %v1008, %v1013
        %v1016 = vunpack.c.l.s4 1934713408
        %v1017 = vunpack.c.0.s8 %v1016
        %v1018 = vperm.slane %v1010, %v1017
        %v1019 = vrot.slane %v1014, 4
        %v1020 = vsel %vm669, %v1019, %v1002
        %v1021 = vrot.slane %v1002, 4
        %v1022 = vsel %vm669, %v1014, %v1021
        %v1023 = vrot.slane %v1018, 4
        %v1024 = vsel %vm669, %v1023, %v1006
        %v1025 = vrot.slane %v1006, 4
        %v1026 = vsel %vm669, %v1018, %v1025
        %v1027 = vpack.c.bf16 %v1020, %v1020
        %v1028 = vpack.c.bf16 %v1022, %v1022
        %v1029 = vpack.c.bf16 %v1024, %v1024
        %v1030 = vpack.c.bf16 %v1026, %v1026
        %vm1031 = vcmask 64512
        %v1033 = vsel %vm1031, %v779, 0
        %v1036 = vsel %vm1031, %v903, 0
        %1038 = vmatpush.bf16.xpose.msra.mxu0 0
        %1039 = vmatpush.bf16.xpose.msra.mxu0 0
        %1040 = vmatpush.bf16.xpose.msra.mxu0 0
        %1041 = vmatpush.bf16.xpose.msra.mxu0 0
        %1042 = vmatpush.bf16.xpose.msra.mxu0 0
        %1043 = vmatpush.bf16.xpose.msra.mxu0 0
        %1044 = vmatpush.bf16.xpose.msra.mxu0 0
        %1045 = vmatpush.bf16.xpose.msra.mxu0 %v1036
        %1046 = vmatmul.bf16.gmra.mxu0 %v1033
        %v1047 = vpop.f32.mrf.mxu0
        %v1048 = vadd.f32 0.0, %v1047
        %v1049 = vpop.f32.mrf.mxu0
        %1050 = vdwg.mxu0
        %v1052 = vsel %vm1031, %v780, 0
        %v1055 = vsel %vm1031, %v904, 0
        %1057 = vmatpush.bf16.xpose.msra.mxu0 0
        %1058 = vmatpush.bf16.xpose.msra.mxu0 0
        %1059 = vmatpush.bf16.xpose.msra.mxu0 0
        %1060 = vmatpush.bf16.xpose.msra.mxu0 0
        %1061 = vmatpush.bf16.xpose.msra.mxu0 0
        %1062 = vmatpush.bf16.xpose.msra.mxu0 0
        %1063 = vmatpush.bf16.xpose.msra.mxu0 0
        %1064 = vmatpush.bf16.xpose.msra.mxu0 %v1055
        %1065 = vmatmul.bf16.gmra.mxu0 %v1052
        %v1066 = vpop.f32.mrf.mxu0
        %v1067 = vadd.f32 0.0, %v1066
        %v1068 = vpop.f32.mrf.mxu0
        %1069 = vdwg.mxu0
        %v1071 = vsel %vm1031, %v781, 0
        %v1074 = vsel %vm1031, %v905, 0
        %1076 = vmatpush.bf16.xpose.msra.mxu0 0
        %1077 = vmatpush.bf16.xpose.msra.mxu0 0
        %1078 = vmatpush.bf16.xpose.msra.mxu0 0
        %1079 = vmatpush.bf16.xpose.msra.mxu0 0
        %1080 = vmatpush.bf16.xpose.msra.mxu0 0
        %1081 = vmatpush.bf16.xpose.msra.mxu0 0
        %1082 = vmatpush.bf16.xpose.msra.mxu0 0
        %1083 = vmatpush.bf16.xpose.msra.mxu0 %v1074
        %1084 = vmatmul.bf16.gmra.mxu0 %v1071
        %v1085 = vpop.f32.mrf.mxu0
        %v1086 = vadd.f32 0.0, %v1085
        %v1087 = vpop.f32.mrf.mxu0
        %1088 = vdwg.mxu0
        %v1090 = vsel %vm1031, %v782, 0
        %v1093 = vsel %vm1031, %v906, 0
        %1095 = vmatpush.bf16.xpose.msra.mxu0 0
        %1096 = vmatpush.bf16.xpose.msra.mxu0 0
        %1097 = vmatpush.bf16.xpose.msra.mxu0 0
        %1098 = vmatpush.bf16.xpose.msra.mxu0 0
        %1099 = vmatpush.bf16.xpose.msra.mxu0 0
        %1100 = vmatpush.bf16.xpose.msra.mxu0 0
        %1101 = vmatpush.bf16.xpose.msra.mxu0 0
        %1102 = vmatpush.bf16.xpose.msra.mxu0 %v1093
        %1103 = vmatmul.bf16.gmra.mxu0 %v1090
        %v1104 = vpop.f32.mrf.mxu0
        %v1105 = vadd.f32 0.0, %v1104
        %v1106 = vpop.f32.mrf.mxu0
        %1107 = vdwg.mxu0
        %v1108 = vsel %vm1031, %v1048, -inf
        %1109 = vmax.xlane.f32.xlu0 %v1108
        %v1110 = vpop.xlane.xlu0 %1109
        %v1111 = vsel %vm1031, %v1067, -inf
        %1112 = vmax.xlane.f32.xlu0 %v1111
        %v1113 = vpop.xlane.xlu0 %1112
        %v1114 = vsel %vm1031, %v1086, -inf
        %1115 = vmax.xlane.f32.xlu0 %v1114
        %v1116 = vpop.xlane.xlu0 %1115
        %v1117 = vsel %vm1031, %v1105, -inf
        %1118 = vmax.xlane.f32.xlu0 %v1117
        %v1119 = vpop.xlane.xlu0 %1118
        %v1120 = vsub.f32 %v1048, %v1110
        %v1121 = vsub.f32 %v1067, %v1113
        %v1122 = vsub.f32 %v1086, %v1116
        %v1123 = vsub.f32 %v1105, %v1119
        %v1124 = vmul.f32 %v1120, 1.442695
        %v1125 = vpow.pop %v1124
        %v1126 = vmul.f32 %v1121, 1.442695
        %v1127 = vpow.pop %v1126
        %v1128 = vmul.f32 %v1122, 1.442695
        %v1129 = vpow.pop %v1128
        %v1130 = vmul.f32 %v1123, 1.442695
        %v1131 = vpow.pop %v1130
        %v1132 = vsel %vm1031, %v1125, 0.0
        %1133 = vadd.xlane.f32.xlu0 %v1132
        %v1134 = vpop.xlane.xlu0 %1133
        %v1135 = vsel %vm1031, %v1127, 0.0
        %1136 = vadd.xlane.f32.xlu0 %v1135
        %v1137 = vpop.xlane.xlu0 %1136
        %v1138 = vsel %vm1031, %v1129, 0.0
        %1139 = vadd.xlane.f32.xlu0 %v1138
        %v1140 = vpop.xlane.xlu0 %1139
        %v1141 = vsel %vm1031, %v1131, 0.0
        %1142 = vadd.xlane.f32.xlu0 %v1141
        %v1143 = vpop.xlane.xlu0 %1142
        %v1144 = vrcp.pop %v1134
        %v1145 = vrcp.pop %v1137
        %v1146 = vrcp.pop %v1140
        %v1147 = vrcp.pop %v1143
        %v1148 = vmul.f32 %v1125, %v1144
        %v1149 = vmul.f32 %v1127, %v1145
        %v1150 = vmul.f32 %v1129, %v1146
        %v1151 = vmul.f32 %v1131, %v1147
        %v1152 = vpack.c.bf16 %v1148, %v1148
        %v1153 = vpack.c.bf16 %v1149, %v1149
        %v1154 = vpack.c.bf16 %v1150, %v1150
        %v1155 = vpack.c.bf16 %v1151, %v1151
        %v1157 = vsel %vm1031, %v1152, 0
        %vm1159 = vcmask 1043456
        %v1161 = vsel %vm1159, %v1027, 0
        %1163 = vmatpush.bf16.msra.mxu0 0
        %1164 = vmatpush.bf16.msra.mxu0 0
        %1165 = vmatpush.bf16.msra.mxu0 0
        %1166 = vmatpush.bf16.msra.mxu0 0
        %1167 = vmatpush.bf16.msra.mxu0 0
        %1168 = vmatpush.bf16.msra.mxu0 0
        %1169 = vmatpush.bf16.msra.mxu0 0
        %1170 = vmatpush.bf16.msra.mxu0 %v1161
        %1171 = vmatmul.bf16.gmra.mxu0 %v1157
        %v1172 = vpop.f32.mrf.mxu0
        %v1173 = vadd.f32 0.0, %v1172
        %v1174 = vpop.f32.mrf.mxu0
        %1175 = vdwg.mxu0
        %v1177 = vsel %vm1031, %v1153, 0
        %v1180 = vsel %vm1159, %v1028, 0
        %1182 = vmatpush.bf16.msra.mxu0 0
        %1183 = vmatpush.bf16.msra.mxu0 0
        %1184 = vmatpush.bf16.msra.mxu0 0
        %1185 = vmatpush.bf16.msra.mxu0 0
        %1186 = vmatpush.bf16.msra.mxu0 0
        %1187 = vmatpush.bf16.msra.mxu0 0
        %1188 = vmatpush.bf16.msra.mxu0 0
        %1189 = vmatpush.bf16.msra.mxu0 %v1180
        %1190 = vmatmul.bf16.gmra.mxu0 %v1177
        %v1191 = vpop.f32.mrf.mxu0
        %v1192 = vadd.f32 0.0, %v1191
        %v1193 = vpop.f32.mrf.mxu0
        %1194 = vdwg.mxu0
        %v1196 = vsel %vm1031, %v1154, 0
        %v1199 = vsel %vm1159, %v1029, 0
        %1201 = vmatpush.bf16.msra.mxu0 0
        %1202 = vmatpush.bf16.msra.mxu0 0
        %1203 = vmatpush.bf16.msra.mxu0 0
        %1204 = vmatpush.bf16.msra.mxu0 0
        %1205 = vmatpush.bf16.msra.mxu0 0
        %1206 = vmatpush.bf16.msra.mxu0 0
        %1207 = vmatpush.bf16.msra.mxu0 0
        %1208 = vmatpush.bf16.msra.mxu0 %v1199
        %1209 = vmatmul.bf16.gmra.mxu0 %v1196
        %v1210 = vpop.f32.mrf.mxu0
        %v1211 = vadd.f32 0.0, %v1210
        %v1212 = vpop.f32.mrf.mxu0
        %1213 = vdwg.mxu0
        %v1215 = vsel %vm1031, %v1155, 0
        %v1218 = vsel %vm1159, %v1030, 0
        %1220 = vmatpush.bf16.msra.mxu0 0
        %1221 = vmatpush.bf16.msra.mxu0 0
        %1222 = vmatpush.bf16.msra.mxu0 0
        %1223 = vmatpush.bf16.msra.mxu0 0
        %1224 = vmatpush.bf16.msra.mxu0 0
        %1225 = vmatpush.bf16.msra.mxu0 0
        %1226 = vmatpush.bf16.msra.mxu0 0
        %1227 = vmatpush.bf16.msra.mxu0 %v1218
        %1228 = vmatmul.bf16.gmra.mxu0 %v1215
        %v1229 = vpop.f32.mrf.mxu0
        %v1230 = vadd.f32 0.0, %v1229
        %v1231 = vpop.f32.mrf.mxu0
        %1232 = vdwg.mxu0
        %v1233 = vrot.slane %v1211, 4
        %v1234 = vsel %vm669, %v1233, %v1173
        %v1235 = vrot.slane %v1173, 4
        %v1236 = vsel %vm669, %v1211, %v1235
        %v1238 = vunpack.c.l.s4 1983009808
        %v1239 = vunpack.c.0.s8 %v1238
        %v1240 = vperm.slane %v1234, %v1239
        %v1242 = vunpack.c.l.s4 1983009808
        %v1243 = vunpack.c.0.s8 %v1242
        %v1244 = vperm.slane %v1236, %v1243
        %v1245 = vrot.slane %v1230, 4
        %v1246 = vsel %vm669, %v1245, %v1192
        %v1247 = vrot.slane %v1192, 4
        %v1248 = vsel %vm669, %v1230, %v1247
        %v1250 = vunpack.c.l.s4 1983009808
        %v1251 = vunpack.c.0.s8 %v1250
        %v1252 = vperm.slane %v1246, %v1251
        %v1254 = vunpack.c.l.s4 1983009808
        %v1255 = vunpack.c.0.s8 %v1254
        %v1256 = vperm.slane %v1248, %v1255
        %v1257 = vrot.slane %v1252, 4
        %v1258 = vsel %vm669, %v1257, %v1240
        %v1259 = vrot.slane %v1240, 4
        %v1260 = vsel %vm669, %v1252, %v1259
        %v1262 = vunpack.c.l.s4 1934713408
        %v1263 = vunpack.c.0.s8 %v1262
        %v1264 = vperm.slane %v1258, %v1263
        %v1266 = vunpack.c.l.s4 1934713408
        %v1267 = vunpack.c.0.s8 %v1266
        %v1268 = vperm.slane %v1260, %v1267
        %v1269 = vrot.slane %v1256, 4
        %v1270 = vsel %vm669, %v1269, %v1244
        %v1271 = vrot.slane %v1244, 4
        %v1272 = vsel %vm669, %v1256, %v1271
        %v1274 = vunpack.c.l.s4 1934713408
        %v1275 = vunpack.c.0.s8 %v1274
        %v1276 = vperm.slane %v1270, %v1275
        %v1278 = vunpack.c.l.s4 1934713408
        %v1279 = vunpack.c.0.s8 %v1278
        %v1280 = vperm.slane %v1272, %v1279
        %v1281 = vrot.slane %v1264, 4
        %v1282 = vsel %vm669, 0.0, %v1281
        %v1283 = vrot.slane %v1268, 4
        %v1284 = vsel %vm669, 0.0, %v1283
        %v1285 = vrot.slane %v1276, 4
        %v1286 = vsel %vm669, 0.0, %v1285
        %v1287 = vrot.slane %v1280, 4
        %v1288 = vsel %vm669, 0.0, %v1287
        %v1289 = vsel %vm669, %v1283, %v1264
        %v1291 = vunpack.c.l.s4 1983009808
        %v1292 = vunpack.c.0.s8 %v1291
        %v1293 = vperm.slane %v1289, %v1292
        %v1294 = vrot.slane %v1284, 4
        %v1295 = vsel %vm669, %v1294, %v1282
        %v1297 = vunpack.c.l.s4 1983009808
        %v1298 = vunpack.c.0.s8 %v1297
        %v1299 = vperm.slane %v1295, %v1298
        %v1300 = vsel %vm669, %v1287, %v1276
        %v1302 = vunpack.c.l.s4 1983009808
        %v1303 = vunpack.c.0.s8 %v1302
        %v1304 = vperm.slane %v1300, %v1303
        %v1305 = vrot.slane %v1288, 4
        %v1306 = vsel %vm669, %v1305, %v1286
        %v1308 = vunpack.c.l.s4 1983009808
        %v1309 = vunpack.c.0.s8 %v1308
        %v1310 = vperm.slane %v1306, %v1309
        %v1311 = vrot.slane %v1299, 4
        %v1312 = vsel %vm669, %v1311, %v1293
        %v1313 = vrot.slane %v1293, 4
        %v1314 = vsel %vm669, %v1299, %v1313
        %v1316 = vunpack.c.l.s4 1934713408
        %v1317 = vunpack.c.0.s8 %v1316
        %v1318 = vperm.slane %v1312, %v1317
        %v1320 = vunpack.c.l.s4 1934713408
        %v1321 = vunpack.c.0.s8 %v1320
        %v1322 = vperm.slane %v1314, %v1321
        %v1323 = vrot.slane %v1310, 4
        %v1324 = vsel %vm669, %v1323, %v1304
        %v1325 = vrot.slane %v1304, 4
        %v1326 = vsel %vm669, %v1310, %v1325
        %v1328 = vunpack.c.l.s4 1934713408
        %v1329 = vunpack.c.0.s8 %v1328
        %v1330 = vperm.slane %v1324, %v1329
        %v1332 = vunpack.c.l.s4 1934713408
        %v1333 = vunpack.c.0.s8 %v1332
        %v1334 = vperm.slane %v1326, %v1333
        %v1335 = vrot.slane %v1330, 4
        %v1336 = vsel %vm669, %v1335, %v1318
        %v1337 = vrot.slane %v1318, 4
        %v1338 = vsel %vm669, %v1330, %v1337
        %v1339 = vrot.slane %v1334, 4
        %v1340 = vsel %vm669, %v1339, %v1322
        %v1341 = vrot.slane %v1322, 4
        %v1342 = vsel %vm669, %v1334, %v1341
        %1344 = vrot.lane.b32.xlu0 %v1338, 8
        %v1345 = vpop.permute.xlu0 %1344
        %1348 = vrot.lane.b32.xlu0 %v1340, 16
        %v1349 = vpop.permute.xlu0 %1348
        %1352 = vrot.lane.b32.xlu0 %v1342, 24
        %v1353 = vpop.permute.xlu0 %1352
        %v1355 = vsel %vm1031, %v1336, %v1345
        %vm1356 = vcmask 130048
        %v1357 = vsel %vm1356, %v1355, %v1349
        %vm1358 = vcmask 195584
        %v1359 = vsel %vm1358, %v1357, %v1353
        %v1360 = vpack.c.bf16 %v1359, %v1359
        %v1361 = vld [vmem:[#allocation13] sm:$0xf]
        %v1362 = vld [vmem:[#allocation13 + $0x4] sm:$0xf]
        %v1363 = vld [vmem:[#allocation13 + $0x8] sm:$0xf]
        %v1364 = vld [vmem:[#allocation13 + $0xc] sm:$0xf]
        %v1365 = vld [vmem:[%s10] sm:$0x1]
        %v1367 = vperm.slane %v1365, 0
        %v1373 = vunpack.c.l.b16 %v1361
        %v1374 = vunpack.c.l.b16 %v1362
        %v1375 = vunpack.c.l.b16 %v1363
        %v1376 = vunpack.c.l.b16 %v1364
        %v1377 = vpack.c.b16 %v1374, %v1373
        %v1378 = vpack.c.b16 %v1376, %v1375
        %v1382 = vsel %vm569, %v1360, 0
        %1384 = vmatpush.bf16.msra.mxu0 0
        %1385 = vmatpush.bf16.msra.mxu0 0
        %1386 = vmatpush.bf16.msra.mxu0 0
        %1387 = vmatpush.bf16.msra.mxu0 0
        %1388 = vmatpush.bf16.msra.mxu0 0
        %1389 = vmatpush.bf16.msra.mxu0 0
        %1390 = vmatpush.bf16.msra.mxu0 %v1378
        %1391 = vmatpush.bf16.msra.mxu0 %v1377
        %1392 = vmatmul.bf16.gmra.mxu0 %v1382
        %v1393 = vpop.f32.mrf.mxu0
        %v1394 = vadd.f32 %v1367, %v1393
        %v1395 = vpop.f32.mrf.mxu0
        %1396 = vdwg.mxu0
        %1397 = vst.msk [vmem:[%s544] sm:$0xff] %vm569, %v1394
        %s1398 = sand.u32 %s287, 1
        %s1399 = scalar_lea.sflag [#allocation4], %s1398
        %s1400 = sand.u32 %s287, 1
        %s1401 = smul.addr %s1400, 8
        %s1402 = scalar_lea.vmem [#allocation14], %s1401
        // Predicated region
        $region93: #{tpu_custom_call.1} parent=63 // pred_check
          %p1403 = pneg %p297
        $region94: #{tpu_custom_call.1} parent=63 // pred_check_branch
          %1405 = sbr.rel (%p1403) target = $region96
        $region95: #{tpu_custom_call.1} parent=63 // pred_region
          %1407 = vsyncadd %s1399, 0
          %s1408 = smul.addr %s33, 8
          %s1409 = scalar_lea.hbm %s11, %s1408
          %s1411 = sshll.u32 %s1402, 4
          %s1412 = int_to_ptr.vmem [resolvable:$true] %s1411
          %s1413 = sshll.u32 %s1409, 4
          %s1414 = int_to_ptr.hbm [resolvable:$true] %s1413
          %1416 = dma.vmem_to_hbm [thread:$0]  %s1412, 128, %s1414, %s1399
        $region96: #{tpu_custom_call.1} parent=63 // pred_fallthru
          _
      $region64: #{tpu_custom_call.1} parent=5 // pred_fallthru
        _
      %p1417 = scmp.le.s32.totalorder 2, %s28
      // Predicated region
      $region97: #{tpu_custom_call.1} parent=5 // pred_check
        %p1418 = pneg %p1417
      $region98: #{tpu_custom_call.1} parent=5 // pred_check_branch
        %1420 = sbr.rel (%p1418) target = $region100
      $region99: #{tpu_custom_call.1} parent=5 // pred_region
        %s1421 = ssub.s32 %s28, 2
        // Predicated region
        $region101: #{tpu_custom_call.1} parent=99 // pred_check
          %p1422 = pneg %p303
        $region102: #{tpu_custom_call.1} parent=99 // pred_check_branch
          %1424 = sbr.rel (%p1422) target = $region104
        $region103: #{tpu_custom_call.1} parent=99 // pred_region
          %s1425 = sand.u32 %s288, 1
          %s1426 = scalar_lea.sflag [#allocation4], %s1425
          %s1427 = sand.u32 %s288, 1
          %s1428 = smul.addr %s1427, 8
          %s1429 = scalar_lea.vmem [#allocation14], %s1428
          %1431 = dma.done %s1426, 128
        $region104: #{tpu_custom_call.1} parent=99 // pred_fallthru
          _
      $region100: #{tpu_custom_call.1} parent=5 // pred_fallthru
        _
    $region6: #{tpu_custom_call.1} parent=1 // loop_footer
      %s32 = sadd.s32 1, %s28
    $region7: #{tpu_custom_call.1} parent=1 // loop_footer_branch
      %27 = sbr.rel target = $region3
    $region8: #{tpu_custom_call.1} parent=1 // loop_exit
      _
    %1432 = vsyncpa [#allocation3], 1
    %s1433 = scalar_lea.sflag [#allocation3], 1
    %1434 = vsyncpa %s1433, 1
    %1435 = vsyncpa [#allocation6], 1
    %s1436 = scalar_lea.sflag [#allocation6], 1
    %1437 = vsyncpa %s1436, 1
    %1438 = vsyncpa [#allocation9], 1
    %1439 = vsyncpa [#allocation12], 1
    %1440 = vsyncpa [#allocation4], 1
    %s1441 = scalar_lea.sflag [#allocation4], 1
    %1442 = vsyncpa %s1441, 1

</llo_original>
